<compile_context>
chip_gen: v6e
topology: v6e:2x2x1
jax: 0.10.0
libtpu: 0.0.40
codegen_flags: <defaults>
</compile_context>

<pallas_src>
import jax
import jax.numpy as jnp
from jax.experimental import pallas as pl
from jax.experimental.pallas import tpu as pltpu

N_NODES = 20          # fixed by GCNNet / BatchNorm1d(20)
FEAT_DIM = 512        # ResNet backbone channels (gc1 in_features)
SPATIAL = 8           # backbone output spatial; MaxPool2d(8) -> 1x1
BN_EPS = 1e-5
GCN_DIMS = [(512, 256), (256, 128), (128, 64), (64, 32), (32, 1)]


def _softplus(x):
    # nn.Softplus(beta=1, threshold=20): x if x > 20 else log1p(exp(x)).
    return jnp.where(x > 20.0, x, jnp.log1p(jnp.exp(jnp.minimum(x, 20.0))))


# ---------------------------------------------------------------------------
# Kernel 1: streamed MaxPool2d(8) over the spatial axis (HBM-bandwidth bound)
# ---------------------------------------------------------------------------
def pool_kernel(x_ref, o_ref):
    # x_ref block: (BB, 20, 64, 512) -- spatial(64) on sublanes, C(512) lanes.
    # Max over spatial is a cheap vreg-wise VPU reduce; output keeps the input
    # dtype (max of bf16 inputs is exact) so the pooled writeback is half-width.
    o_ref[...] = jnp.max(x_ref[...], axis=2).astype(o_ref.dtype)


# ---------------------------------------------------------------------------
# Kernel 2: adjacency norm + 5x GCN + BatchNorm1d(20) + Softplus + node mean
# ---------------------------------------------------------------------------
def gcn_head_kernel(feat_ref, a_ref, w1_ref, w2_ref, w3_ref, w4_ref, w5_ref,
                    bng_ref, bnb_ref, score_ref):
    B = feat_ref.shape[0]
    h = feat_ref[...]                                        # (B, 20, 512) bf16

    # ---- norm_adj: D^{-1/2} A D^{-1/2}, D = diag(rowsum(A)) ----
    # (no epsilon, matching torch: zero-degree rows would be inf there too)
    A = a_ref[...]                                           # (B, 20, 20) f32
    deg = jnp.sum(A, axis=2, keepdims=True)                  # (B, 20, 1)
    dinv = jax.lax.rsqrt(deg)
    adj = (A * dinv * jnp.swapaxes(dinv, 1, 2)).astype(jnp.bfloat16)

    # Hoisted single load of all BN affine params.
    bn_g = bng_ref[...]                                      # (4, 20, 1)
    bn_b = bnb_ref[...]                                      # (4, 20, 1)

    def gcn_layer(hh, w_ref):
        # out[b] = adj[b] @ (hh[b] @ W): per-batch 2-D bf16 MXU matmuls with
        # f32 accumulation.  Avoids the (B,20)->B*20 reshape relayouts
        # (20 % 8 != 0) and the 20-deep serial VPU aggregation chain.
        w = w_ref[...].astype(jnp.bfloat16)
        outs = []
        for b in range(B):
            sup = jnp.dot(hh[b].astype(jnp.bfloat16), w,
                          preferred_element_type=jnp.float32)      # (20, Cout)
            agg = jnp.dot(adj[b], sup.astype(jnp.bfloat16),
                          preferred_element_type=jnp.float32)      # (20, Cout)
            outs.append(agg)
        return jnp.stack(outs, axis=0)                       # (B, 20, Cout) f32

    def batchnorm_nodes(hh, gamma, beta):
        # BatchNorm1d(20) in training mode on (B, 20, C): biased batch stats
        # over (B, C) per node channel, eps=1e-5, affine.
        mean = jnp.mean(hh, axis=(0, 2), keepdims=True)      # (1, 20, 1)
        var = jnp.mean((hh - mean) ** 2, axis=(0, 2), keepdims=True)
        xhat = (hh - mean) * jax.lax.rsqrt(var + BN_EPS)
        return xhat * gamma[None, :, :] + beta[None, :, :]

    # ---- 4 x (GCN -> BN -> Softplus) ----
    for li, w_ref in enumerate((w1_ref, w2_ref, w3_ref, w4_ref)):
        h = gcn_layer(h, w_ref)
        h = batchnorm_nodes(h, bn_g[li], bn_b[li])
        h = _softplus(h)

    # ---- final GCN (32 -> 1) + Softplus ----
    h = gcn_layer(h, w5_ref)                                 # (B, 20, 1)
    h = _softplus(h)

    # ---- score = mean over the 20 nodes -> (B, 1) ----
    score_ref[...] = jnp.mean(h, axis=1)


# ---------------------------------------------------------------------------
# Params & wrapper
# ---------------------------------------------------------------------------
def init_params(key):
    """Deterministic parameter init matching the module's __init__."""
    keys = jax.random.split(key, len(GCN_DIMS))
    ws = []
    for k, (fi, fo) in zip(keys, GCN_DIMS):
        std = (2.0 / (fi + fo)) ** 0.5                       # xavier_normal_
        ws.append(std * jax.random.normal(k, (fi, fo), jnp.float32))
    bn_gamma = jnp.ones((4, N_NODES, 1), jnp.float32)        # BN default init
    bn_beta = jnp.zeros((4, N_NODES, 1), jnp.float32)
    return ws, bn_gamma, bn_beta


def _pool_batch_block(B, itemsize):
    """Batch block for the pool: big enough to amortize the ~0.35us per-step
    overhead, small enough to keep double-buffered slabs modest, and leaving
    at least 2 grid steps so the 'parallel' axis still splits across the two
    TensorCores on v7x."""
    if B <= 1:
        return 1
    per_b = N_NODES * SPATIAL * SPATIAL * FEAT_DIM * itemsize
    bb_vmem = max(1, (24 << 20) // (2 * per_b))              # <~24 MiB dbl-buf
    return max(1, min(8, bb_vmem, B // 2))


def oiqa_forward(x_maps, label, A, ws, bn_gamma, bn_beta, requires_loss=True):
    """x_maps: (B, 20, 8, 8, 512) channels-last post-backbone feature maps
    (bf16 preferred; any float dtype accepted)."""
    B = x_maps.shape[0]
    # Free (contiguous) reshape: (B, 20, 8, 8, C) -> (B, 20, 64, C).
    x_k = x_maps.reshape(B, N_NODES, SPATIAL * SPATIAL, FEAT_DIM)
    itemsize = x_k.dtype.itemsize

    BB = _pool_batch_block(B, itemsize)
    grid_b = pl.cdiv(B, BB)

    pooled_bytes = B * N_NODES * FEAT_DIM * itemsize
    cost = pl.CostEstimate(
        flops=int(x_k.size),                                 # ~1 cmp / element
        transcendentals=0,
        bytes_accessed=int(x_k.size) * itemsize + pooled_bytes,
    )

    # Raise the scoped-VMEM limit only when the double-buffered working set
    # would exceed v5e's 16 MiB default (v6e/v7x default 32 MiB already fits).
    work_bytes = 2 * BB * (N_NODES * SPATIAL * SPATIAL * FEAT_DIM
                           + N_NODES * FEAT_DIM) * itemsize
    cp_kwargs = dict(dimension_semantics=("parallel",))      # megacore on v7x
    if work_bytes > (14 << 20):
        cp_kwargs["vmem_limit_bytes"] = 32 * 1024 * 1024

    # ---- streamed, pipelined MaxPool over the batch grid ----
    pooled = pl.pallas_call(
        pool_kernel,
        out_shape=jax.ShapeDtypeStruct((B, N_NODES, FEAT_DIM), x_k.dtype),
        grid=(grid_b,),
        in_specs=[pl.BlockSpec((BB, N_NODES, SPATIAL * SPATIAL, FEAT_DIM),
                               lambda b: (b, 0, 0, 0))],
        out_specs=pl.BlockSpec((BB, N_NODES, FEAT_DIM), lambda b: (b, 0, 0)),
        compiler_params=pltpu.CompilerParams(**cp_kwargs),
        cost_estimate=cost,
    )(x_k)

    # ---- tiny GCN / BN / Softplus head: single VMEM-resident call ----
    score = pl.pallas_call(
        gcn_head_kernel,
        out_shape=jax.ShapeDtypeStruct((B, 1), jnp.float32),
        in_specs=[pl.BlockSpec(memory_space=pltpu.MemorySpace.VMEM)] * 9,
        out_specs=pl.BlockSpec(memory_space=pltpu.MemorySpace.VMEM),
    )(pooled, A, ws[0], ws[1], ws[2], ws[3], ws[4], bn_gamma, bn_beta)

    if requires_loss:
        loss = jnp.mean((score - label) ** 2)                # F.mse_loss (mean)
        return score, label, loss
    return score


if __name__ == "__main__":
    key = jax.random.PRNGKey(0)
    k_x, k_a, k_l, k_p = jax.random.split(key, 4)

    B = 2
    # Post-backbone feature maps, channels-last bf16 (stand-in for
    # resnet(x.view(-1,3,256,256)) emitting NHWC on TPU).
    x_maps = jax.random.normal(
        k_x, (B, N_NODES, SPATIAL, SPATIAL, FEAT_DIM), jnp.bfloat16)
    # Positive adjacency so row degrees are invertible.
    A = jax.random.uniform(k_a, (B, N_NODES, N_NODES), jnp.float32, 0.1, 1.0)
    label = jax.random.normal(k_l, (B, 1), jnp.float32)

    ws, bn_g, bn_b = init_params(k_p)

    score, lbl, loss = oiqa_forward(x_maps, label, A, ws, bn_g, bn_b,
                                    requires_loss=True)
    jax.block_until_ready((score, lbl, loss))
    assert score.shape == (B, 1) and loss.shape == ()
    print("KERNEL_OK")
</pallas_src>

<mosaic_0001>
module attributes {stable_mosaic.version = 11 : i64} {
  func.func @pool_kernel(%arg0: i32, %arg1: memref<1x20x64x512xbf16, #tpu.memory_space<vmem>>, %arg2: memref<1x20x512xbf16, #tpu.memory_space<vmem>>) attributes {dimension_semantics = [#tpu.dimension_semantics<parallel>], iteration_bounds = array<i64: 2>, scalar_prefetch = 0 : i64, scratch_operands = 0 : i64, tpu.core_type = #tpu.core_type<tc>, window_params = [{transform_indices = @transform_0, window_bounds = array<i64: 1, 20, 64, 512>}, {transform_indices = @transform_1, window_bounds = array<i64: 1, 20, 512>}]} {
    %c0 = arith.constant 0 : index
    %c0_0 = arith.constant 0 : index
    %c0_1 = arith.constant 0 : index
    %c0_2 = arith.constant 0 : index
    %0 = vector.load %arg1[%c0, %c0_0, %c0_1, %c0_2] : memref<1x20x64x512xbf16, #tpu.memory_space<vmem>>, vector<1x20x64x512xbf16>
    %cst = arith.constant dense<0xFF80> : vector<1x20x512xbf16>
    %1 = vector.multi_reduction <maximumf>, %0, %cst [2] : vector<1x20x64x512xbf16> to vector<1x20x512xbf16>
    %c0_3 = arith.constant 0 : index
    %c0_4 = arith.constant 0 : index
    %c0_5 = arith.constant 0 : index
    %2 = vector.load %arg2[%c0_3, %c0_4, %c0_5] : memref<1x20x512xbf16, #tpu.memory_space<vmem>>, vector<1x20x512xbf16>
    tpu.vector_store %arg2[%c0_3, %c0_4, %c0_5], %1 {strides = array<i32>} : memref<1x20x512xbf16, #tpu.memory_space<vmem>>, vector<1x20x512xbf16>,
    return
  }
  func.func @transform_0(%arg0: i32) -> (i32, i32, i32, i32) {
    %c0_i32 = arith.constant 0 : i32
    %c0_i32_0 = arith.constant 0 : i32
    %c0_i32_1 = arith.constant 0 : i32
    %c0_i32_2 = arith.constant 0 : i32
    return %arg0, %c0_i32, %c0_i32_0, %c0_i32_1 : i32, i32, i32, i32
  }
  func.func @transform_1(%arg0: i32) -> (i32, i32, i32) {
    %c0_i32 = arith.constant 0 : i32
    %c0_i32_0 = arith.constant 0 : i32
    %c0_i32_1 = arith.constant 0 : i32
    return %arg0, %c0_i32, %c0_i32_0 : i32, i32, i32
  }
}

</mosaic_0001>

<llo_original>
// kernel: tpu_custom_call.1
$region0: #{tpu_custom_call.1}
  #allocation0 [shape = 'u32[]', space=smem, size = 0x4, offset = 0x4, fixed_abs, tag = 'smem constant byte address 0x4 - core index']
  #allocation1 [shape = 'u32[144,128]{1,0:T(1,128)}', space=vmem, size = 0x12000, scoped, tag = 'internal scratch']
  %s0 = inlined_call_operand.hbm [shape: bf16[2,20,64,512], index: 0, kind: input, shape index: {}]
  %s1 = inlined_call_operand.vmem [shape: bf16[2,20,512], index: 1, kind: output, shape index: {}]
  %s2 = sld [smem:[#allocation0]]
  $region41: #{tpu_custom_call.1} parent=0
    _
  %s4 = ssub.s32 1, %s2
  %s5 = scalar_select 0, %s4, %s2
  $region1: #{tpu_custom_call.1} parent=0
    #allocation2 [shape = 'u8[2621440]{0}', space=vmem, size = 0x280000, scoped, tag = 'input window, operand 0']
    #allocation3 [shape = 's32[2]{0}', space=sflag, size = 0x8, scoped, tag = 'scoped memory for tpu_custom_call.1']
    %6 = vsyncpa [#allocation3], 0
    %s7 = scalar_lea.sflag [#allocation3], 1
    %8 = vsyncpa %s7, 0
    loop: start=0, step=1, limit=4
    $region2: #{tpu_custom_call.1} parent=1 // loop_pre_header
      _
    $region3: #{tpu_custom_call.1} parent=1 // loop_header
      %s10 = sphi 0, %s14
      %p11 = scmp.ge.s32.totalorder %s10, 4
      %s20 = sphi 0, %s22
      %s23 = sphi 0, %s20
      %s24 = sphi 0, %s23
      %s40 = sphi 0, %s24
      %s46 = sphi 0, %s48
      %s49 = sphi 0, %s46
      %s50 = sphi 0, %s49
      %s66 = sphi 0, %s50
    $region4: #{tpu_custom_call.1} parent=1 // loop_header_branch
      %13 = sbr.rel (%p11) target = $region8
    $region5: #{tpu_custom_call.1} parent=1 // loop_body
      %s15 = ssub.s32 %s10, 1
      %s16 = ssub.s32 %s10, 2
      %s17 = sadd.s32 %s10, 1
      %s18 = ssub.s32 %s10, %s17
      %p19 = scmp.eq.s32.totalorder %s18, 0
      %s21 = sadd.s32 %s20, 1
      %s22 = scalar_select %p19, %s20, %s21
      %p25 = pneg %p19
      %p26 = scmp.eq.s32.totalorder %s10, 1
      %p27 = por %p25, %p26
      %p28 = scmp.ne.s32.totalorder %s20, %s23
      %p29 = scmp.eq.s32.totalorder %s10, 0
      %p30 = por %p28, %p29
      %p31 = scmp.ne.s32.totalorder %s20, %s23
      %p32 = scmp.eq.s32.totalorder %s15, 1
      %p33 = por %p31, %p32
      %p34 = scmp.ne.s32.totalorder %s23, %s24
      %p35 = scmp.eq.s32.totalorder %s15, 0
      %p36 = por %p34, %p35
      %p37 = scmp.ne.s32.totalorder %s23, %s24
      %p38 = scmp.eq.s32.totalorder %s16, 1
      %p39 = por %p37, %p38
      %p41 = scmp.ne.s32.totalorder %s24, %s40
      %p42 = scmp.eq.s32.totalorder %s16, 0
      %p43 = por %p41, %p42
      %s44 = ssub.s32 %s10, %s17
      %p45 = scmp.eq.s32.totalorder %s44, 0
      %s47 = sadd.s32 %s46, 1
      %s48 = scalar_select %p45, %s46, %s47
      %p51 = pneg %p45
      %p52 = scmp.eq.s32.totalorder %s10, 1
      %p53 = por %p51, %p52
      %p54 = scmp.ne.s32.totalorder %s46, %s49
      %p55 = scmp.eq.s32.totalorder %s10, 0
      %p56 = por %p54, %p55
      %p57 = scmp.ne.s32.totalorder %s46, %s49
      %p58 = scmp.eq.s32.totalorder %s15, 1
      %p59 = por %p57, %p58
      %p60 = scmp.ne.s32.totalorder %s49, %s50
      %p61 = scmp.eq.s32.totalorder %s15, 0
      %p62 = por %p60, %p61
      %p63 = scmp.ne.s32.totalorder %s49, %s50
      %p64 = scmp.eq.s32.totalorder %s16, 1
      %p65 = por %p63, %p64
      %p67 = scmp.ne.s32.totalorder %s50, %s66
      %p68 = scmp.eq.s32.totalorder %s16, 0
      %p69 = por %p67, %p68
      %p70 = scmp.le.s32.totalorder 1, %s10
      %p71 = scmp.lt.s32.totalorder %s10, 3
      %p72 = pnand %p70, %p71
      %p73 = pneg %p72
      // Predicated region
      $region9: #{tpu_custom_call.1} parent=5 // pred_check
        _
      $region10: #{tpu_custom_call.1} parent=5 // pred_check_branch
        %75 = sbr.rel (%p72) target = $region12
      $region11: #{tpu_custom_call.1} parent=5 // pred_region
        %s76 = ssub.s32 %s10, 1
      $region12: #{tpu_custom_call.1} parent=5 // pred_fallthru
        _
      %p77 = scmp.lt.s32.totalorder %s10, 2
      // Predicated region
      $region13: #{tpu_custom_call.1} parent=5 // pred_check
        %p78 = pneg %p77
      $region14: #{tpu_custom_call.1} parent=5 // pred_check_branch
        %80 = sbr.rel (%p78) target = $region16
      $region15: #{tpu_custom_call.1} parent=5 // pred_region
        // Predicated region
        $region17: #{tpu_custom_call.1} parent=15 // pred_check
          %p81 = pneg %p30
        $region18: #{tpu_custom_call.1} parent=15 // pred_check_branch
          %83 = sbr.rel (%p81) target = $region20
        $region19: #{tpu_custom_call.1} parent=15 // pred_region
          %s84 = sand.u32 %s20, 1
          %s85 = scalar_lea.sflag [#allocation3], %s84
          %s86 = sand.u32 %s20, 1
          %s87 = smul.addr %s86, 2560
          %s88 = scalar_lea.vmem [#allocation2], %s87
          %s90 = ssub.s32 40960, 40960
          %91 = vsyncadd %s85, %s90
          %s92 = smul.addr %s10, 640
          %s93 = smul.addr %s92, 64
          %s94 = scalar_lea.hbm %s0, %s93
          %s95 = sshll.u32 %s88, 4
          %s96 = int_to_ptr.vmem [resolvable:$true] %s95
          %101 = dma.hbm_to_vmem [thread:$0]  %s94, 40960, %s96, %s85, 256, 256, 16
        $region20: #{tpu_custom_call.1} parent=15 // pred_fallthru
          _
      $region16: #{tpu_custom_call.1} parent=5 // pred_fallthru
        _
      %p102 = scmp.le.s32.totalorder 1, %s10
      %p103 = scmp.lt.s32.totalorder %s10, 3
      %p104 = pnand %p102, %p103
      %p105 = pneg %p104
      // Predicated region
      $region21: #{tpu_custom_call.1} parent=5 // pred_check
        _
      $region22: #{tpu_custom_call.1} parent=5 // pred_check_branch
        %107 = sbr.rel (%p104) target = $region24
      $region23: #{tpu_custom_call.1} parent=5 // pred_region
        %s108 = ssub.s32 %s10, 1
        %s109 = sand.u32 %s23, 1
        %s110 = scalar_lea.sflag [#allocation3], %s109
        %s111 = sand.u32 %s23, 1
        %s112 = smul.addr %s111, 2560
        %s113 = scalar_lea.vmem [#allocation2], %s112
        // Predicated region
        $region25: #{tpu_custom_call.1} parent=23 // pred_check
          %p114 = pneg %p36
        $region26: #{tpu_custom_call.1} parent=23 // pred_check_branch
          %116 = sbr.rel (%p114) target = $region28
        $region27: #{tpu_custom_call.1} parent=23 // pred_region
          %117 = dma.done %s110, 40960
        $region28: #{tpu_custom_call.1} parent=23 // pred_fallthru
          _
        %s118 = sand.u32 %s23, 1
        %s119 = scalar_lea.sflag [#allocation3], %s118
        %s120 = sand.u32 %s23, 1
        %s121 = smul.addr %s120, 2560
        %s122 = scalar_lea.vmem [#allocation2], %s121
        %p123 = pneg %p36
        %p124 = pneg %p33
        %p125 = pneg %p62
        %p126 = pneg %p59
        %p127 = scmp.lt.s32.totalorder %s15, 1
        %s128 = scalar_select %p127, %s15, 1
        %s129 = smul.addr %s128, 12
        %s130 = smul.addr %s129, 4
        %s131 = scalar_lea.vmem %s1, %s130
        %p132 = scmp.lt.s32.totalorder %s15, 1
        %s133 = scalar_select %p132, %s15, 1
        %s134 = smul.addr %s133, 12
        %s135 = smul.addr %s134, 4
        %s136 = scalar_lea.vmem %s1, %s135
        %v137 = vld [vmem:[%s113] sm:$0xff]
        %v138 = vld [vmem:[%s113 + $0x8] sm:$0xff]
        %v139 = vld [vmem:[%s113 + $0x10] sm:$0xff]
        %v140 = vld [vmem:[%s113 + $0x18] sm:$0xff]
        %v141 = vld [vmem:[%s113 + $0x20] sm:$0xff]
        %v142 = vld [vmem:[%s113 + $0x28] sm:$0xff]
        %v143 = vld [vmem:[%s113 + $0x30] sm:$0xff]
        %v144 = vld [vmem:[%s113 + $0x38] sm:$0xff]
        %v145 = vld [vmem:[%s113 + $0x40] sm:$0xff]
        %v146 = vld [vmem:[%s113 + $0x48] sm:$0xff]
        %v147 = vld [vmem:[%s113 + $0x50] sm:$0xff]
        %v148 = vld [vmem:[%s113 + $0x58] sm:$0xff]
        %v149 = vld [vmem:[%s113 + $0x60] sm:$0xff]
        %v150 = vld [vmem:[%s113 + $0x68] sm:$0xff]
        %v151 = vld [vmem:[%s113 + $0x70] sm:$0xff]
        %v152 = vld [vmem:[%s113 + $0x78] sm:$0xff]
        %v153 = vld [vmem:[%s113 + $0x80] sm:$0xff]
        %v154 = vld [vmem:[%s113 + $0x88] sm:$0xff]
        %v155 = vld [vmem:[%s113 + $0x90] sm:$0xff]
        %v156 = vld [vmem:[%s113 + $0x98] sm:$0xff]
        %v157 = vld [vmem:[%s113 + $0xa0] sm:$0xff]
        %v158 = vld [vmem:[%s113 + $0xa8] sm:$0xff]
        %v159 = vld [vmem:[%s113 + $0xb0] sm:$0xff]
        %v160 = vld [vmem:[%s113 + $0xb8] sm:$0xff]
        %v161 = vld [vmem:[%s113 + $0xc0] sm:$0xff]
        %v162 = vld [vmem:[%s113 + $0xc8] sm:$0xff]
        %v163 = vld [vmem:[%s113 + $0xd0] sm:$0xff]
        %v164 = vld [vmem:[%s113 + $0xd8] sm:$0xff]
        %v165 = vld [vmem:[%s113 + $0xe0] sm:$0xff]
        %v166 = vld [vmem:[%s113 + $0xe8] sm:$0xff]
        %v167 = vld [vmem:[%s113 + $0xf0] sm:$0xff]
        %v168 = vld [vmem:[%s113 + $0xf8] sm:$0xff]
        %v169 = vld [vmem:[%s113 + $0x100] sm:$0xff]
        %v170 = vld [vmem:[%s113 + $0x108] sm:$0xff]
        %v171 = vld [vmem:[%s113 + $0x110] sm:$0xff]
        %v172 = vld [vmem:[%s113 + $0x118] sm:$0xff]
        %v173 = vld [vmem:[%s113 + $0x120] sm:$0xff]
        %v174 = vld [vmem:[%s113 + $0x128] sm:$0xff]
        %v175 = vld [vmem:[%s113 + $0x130] sm:$0xff]
        %v176 = vld [vmem:[%s113 + $0x138] sm:$0xff]
        %v177 = vld [vmem:[%s113 + $0x140] sm:$0xff]
        %v178 = vld [vmem:[%s113 + $0x148] sm:$0xff]
        %v179 = vld [vmem:[%s113 + $0x150] sm:$0xff]
        %v180 = vld [vmem:[%s113 + $0x158] sm:$0xff]
        %v181 = vld [vmem:[%s113 + $0x160] sm:$0xff]
        %v182 = vld [vmem:[%s113 + $0x168] sm:$0xff]
        %v183 = vld [vmem:[%s113 + $0x170] sm:$0xff]
        %v184 = vld [vmem:[%s113 + $0x178] sm:$0xff]
        %v185 = vld [vmem:[%s113 + $0x180] sm:$0xff]
        %v186 = vld [vmem:[%s113 + $0x188] sm:$0xff]
        %v187 = vld [vmem:[%s113 + $0x190] sm:$0xff]
        %v188 = vld [vmem:[%s113 + $0x198] sm:$0xff]
        %v189 = vld [vmem:[%s113 + $0x1a0] sm:$0xff]
        %v190 = vld [vmem:[%s113 + $0x1a8] sm:$0xff]
        %v191 = vld [vmem:[%s113 + $0x1b0] sm:$0xff]
        %v192 = vld [vmem:[%s113 + $0x1b8] sm:$0xff]
        %v193 = vld [vmem:[%s113 + $0x1c0] sm:$0xff]
        %v194 = vld [vmem:[%s113 + $0x1c8] sm:$0xff]
        %v195 = vld [vmem:[%s113 + $0x1d0] sm:$0xff]
        %v196 = vld [vmem:[%s113 + $0x1d8] sm:$0xff]
        %v197 = vld [vmem:[%s113 + $0x1e0] sm:$0xff]
        %v198 = vld [vmem:[%s113 + $0x1e8] sm:$0xff]
        %v199 = vld [vmem:[%s113 + $0x1f0] sm:$0xff]
        %v200 = vld [vmem:[%s113 + $0x1f8] sm:$0xff]
        %v201 = vld [vmem:[%s113 + $0x200] sm:$0xff]
        %v202 = vld [vmem:[%s113 + $0x208] sm:$0xff]
        %v203 = vld [vmem:[%s113 + $0x210] sm:$0xff]
        %v204 = vld [vmem:[%s113 + $0x218] sm:$0xff]
        %v205 = vld [vmem:[%s113 + $0x220] sm:$0xff]
        %v206 = vld [vmem:[%s113 + $0x228] sm:$0xff]
        %v207 = vld [vmem:[%s113 + $0x230] sm:$0xff]
        %v208 = vld [vmem:[%s113 + $0x238] sm:$0xff]
        %v209 = vld [vmem:[%s113 + $0x240] sm:$0xff]
        %v210 = vld [vmem:[%s113 + $0x248] sm:$0xff]
        %v211 = vld [vmem:[%s113 + $0x250] sm:$0xff]
        %v212 = vld [vmem:[%s113 + $0x258] sm:$0xff]
        %v213 = vld [vmem:[%s113 + $0x260] sm:$0xff]
        %v214 = vld [vmem:[%s113 + $0x268] sm:$0xff]
        %v215 = vld [vmem:[%s113 + $0x270] sm:$0xff]
        %v216 = vld [vmem:[%s113 + $0x278] sm:$0xff]
        %v217 = vld [vmem:[%s113 + $0x280] sm:$0xff]
        %v218 = vld [vmem:[%s113 + $0x288] sm:$0xff]
        %v219 = vld [vmem:[%s113 + $0x290] sm:$0xff]
        %v220 = vld [vmem:[%s113 + $0x298] sm:$0xff]
        %v221 = vld [vmem:[%s113 + $0x2a0] sm:$0xff]
        %v222 = vld [vmem:[%s113 + $0x2a8] sm:$0xff]
        %v223 = vld [vmem:[%s113 + $0x2b0] sm:$0xff]
        %v224 = vld [vmem:[%s113 + $0x2b8] sm:$0xff]
        %v225 = vld [vmem:[%s113 + $0x2c0] sm:$0xff]
        %v226 = vld [vmem:[%s113 + $0x2c8] sm:$0xff]
        %v227 = vld [vmem:[%s113 + $0x2d0] sm:$0xff]
        %v228 = vld [vmem:[%s113 + $0x2d8] sm:$0xff]
        %v229 = vld [vmem:[%s113 + $0x2e0] sm:$0xff]
        %v230 = vld [vmem:[%s113 + $0x2e8] sm:$0xff]
        %v231 = vld [vmem:[%s113 + $0x2f0] sm:$0xff]
        %v232 = vld [vmem:[%s113 + $0x2f8] sm:$0xff]
        %v233 = vld [vmem:[%s113 + $0x300] sm:$0xff]
        %v234 = vld [vmem:[%s113 + $0x308] sm:$0xff]
        %v235 = vld [vmem:[%s113 + $0x310] sm:$0xff]
        %v236 = vld [vmem:[%s113 + $0x318] sm:$0xff]
        %v237 = vld [vmem:[%s113 + $0x320] sm:$0xff]
        %v238 = vld [vmem:[%s113 + $0x328] sm:$0xff]
        %v239 = vld [vmem:[%s113 + $0x330] sm:$0xff]
        %v240 = vld [vmem:[%s113 + $0x338] sm:$0xff]
        %v241 = vld [vmem:[%s113 + $0x340] sm:$0xff]
        %v242 = vld [vmem:[%s113 + $0x348] sm:$0xff]
        %v243 = vld [vmem:[%s113 + $0x350] sm:$0xff]
        %v244 = vld [vmem:[%s113 + $0x358] sm:$0xff]
        %v245 = vld [vmem:[%s113 + $0x360] sm:$0xff]
        %v246 = vld [vmem:[%s113 + $0x368] sm:$0xff]
        %v247 = vld [vmem:[%s113 + $0x370] sm:$0xff]
        %v248 = vld [vmem:[%s113 + $0x378] sm:$0xff]
        %v249 = vld [vmem:[%s113 + $0x380] sm:$0xff]
        %v250 = vld [vmem:[%s113 + $0x388] sm:$0xff]
        %v251 = vld [vmem:[%s113 + $0x390] sm:$0xff]
        %v252 = vld [vmem:[%s113 + $0x398] sm:$0xff]
        %v253 = vld [vmem:[%s113 + $0x3a0] sm:$0xff]
        %v254 = vld [vmem:[%s113 + $0x3a8] sm:$0xff]
        %v255 = vld [vmem:[%s113 + $0x3b0] sm:$0xff]
        %v256 = vld [vmem:[%s113 + $0x3b8] sm:$0xff]
        %v257 = vld [vmem:[%s113 + $0x3c0] sm:$0xff]
        %v258 = vld [vmem:[%s113 + $0x3c8] sm:$0xff]
        %v259 = vld [vmem:[%s113 + $0x3d0] sm:$0xff]
        %v260 = vld [vmem:[%s113 + $0x3d8] sm:$0xff]
        %v261 = vld [vmem:[%s113 + $0x3e0] sm:$0xff]
        %v262 = vld [vmem:[%s113 + $0x3e8] sm:$0xff]
        %v263 = vld [vmem:[%s113 + $0x3f0] sm:$0xff]
        %v264 = vld [vmem:[%s113 + $0x3f8] sm:$0xff]
        %v265 = vld [vmem:[%s113 + $0x400] sm:$0xff]
        %v266 = vld [vmem:[%s113 + $0x408] sm:$0xff]
        %v267 = vld [vmem:[%s113 + $0x410] sm:$0xff]
        %v268 = vld [vmem:[%s113 + $0x418] sm:$0xff]
        %v269 = vld [vmem:[%s113 + $0x420] sm:$0xff]
        %v270 = vld [vmem:[%s113 + $0x428] sm:$0xff]
        %v271 = vld [vmem:[%s113 + $0x430] sm:$0xff]
        %v272 = vld [vmem:[%s113 + $0x438] sm:$0xff]
        %v273 = vld [vmem:[%s113 + $0x440] sm:$0xff]
        %v274 = vld [vmem:[%s113 + $0x448] sm:$0xff]
        %v275 = vld [vmem:[%s113 + $0x450] sm:$0xff]
        %v276 = vld [vmem:[%s113 + $0x458] sm:$0xff]
        %v277 = vld [vmem:[%s113 + $0x460] sm:$0xff]
        %v278 = vld [vmem:[%s113 + $0x468] sm:$0xff]
        %v279 = vld [vmem:[%s113 + $0x470] sm:$0xff]
        %v280 = vld [vmem:[%s113 + $0x478] sm:$0xff]
        %v281 = vld [vmem:[%s113 + $0x480] sm:$0xff]
        %v282 = vld [vmem:[%s113 + $0x488] sm:$0xff]
        %v283 = vld [vmem:[%s113 + $0x490] sm:$0xff]
        %v284 = vld [vmem:[%s113 + $0x498] sm:$0xff]
        %v285 = vld [vmem:[%s113 + $0x4a0] sm:$0xff]
        %v286 = vld [vmem:[%s113 + $0x4a8] sm:$0xff]
        %v287 = vld [vmem:[%s113 + $0x4b0] sm:$0xff]
        %v288 = vld [vmem:[%s113 + $0x4b8] sm:$0xff]
        %v289 = vld [vmem:[%s113 + $0x4c0] sm:$0xff]
        %v290 = vld [vmem:[%s113 + $0x4c8] sm:$0xff]
        %v291 = vld [vmem:[%s113 + $0x4d0] sm:$0xff]
        %v292 = vld [vmem:[%s113 + $0x4d8] sm:$0xff]
        %v293 = vld [vmem:[%s113 + $0x4e0] sm:$0xff]
        %v294 = vld [vmem:[%s113 + $0x4e8] sm:$0xff]
        %v295 = vld [vmem:[%s113 + $0x4f0] sm:$0xff]
        %v296 = vld [vmem:[%s113 + $0x4f8] sm:$0xff]
        %v297 = vld [vmem:[%s113 + $0x500] sm:$0xff]
        %v298 = vld [vmem:[%s113 + $0x508] sm:$0xff]
        %v299 = vld [vmem:[%s113 + $0x510] sm:$0xff]
        %v300 = vld [vmem:[%s113 + $0x518] sm:$0xff]
        %v301 = vld [vmem:[%s113 + $0x520] sm:$0xff]
        %v302 = vld [vmem:[%s113 + $0x528] sm:$0xff]
        %v303 = vld [vmem:[%s113 + $0x530] sm:$0xff]
        %v304 = vld [vmem:[%s113 + $0x538] sm:$0xff]
        %v305 = vld [vmem:[%s113 + $0x540] sm:$0xff]
        %v306 = vld [vmem:[%s113 + $0x548] sm:$0xff]
        %v307 = vld [vmem:[%s113 + $0x550] sm:$0xff]
        %v308 = vld [vmem:[%s113 + $0x558] sm:$0xff]
        %v309 = vld [vmem:[%s113 + $0x560] sm:$0xff]
        %v310 = vld [vmem:[%s113 + $0x568] sm:$0xff]
        %v311 = vld [vmem:[%s113 + $0x570] sm:$0xff]
        %v312 = vld [vmem:[%s113 + $0x578] sm:$0xff]
        %v313 = vld [vmem:[%s113 + $0x580] sm:$0xff]
        %v314 = vld [vmem:[%s113 + $0x588] sm:$0xff]
        %v315 = vld [vmem:[%s113 + $0x590] sm:$0xff]
        %v316 = vld [vmem:[%s113 + $0x598] sm:$0xff]
        %v317 = vld [vmem:[%s113 + $0x5a0] sm:$0xff]
        %v318 = vld [vmem:[%s113 + $0x5a8] sm:$0xff]
        %v319 = vld [vmem:[%s113 + $0x5b0] sm:$0xff]
        %v320 = vld [vmem:[%s113 + $0x5b8] sm:$0xff]
        %v321 = vld [vmem:[%s113 + $0x5c0] sm:$0xff]
        %v322 = vld [vmem:[%s113 + $0x5c8] sm:$0xff]
        %v323 = vld [vmem:[%s113 + $0x5d0] sm:$0xff]
        %v324 = vld [vmem:[%s113 + $0x5d8] sm:$0xff]
        %v325 = vld [vmem:[%s113 + $0x5e0] sm:$0xff]
        %v326 = vld [vmem:[%s113 + $0x5e8] sm:$0xff]
        %v327 = vld [vmem:[%s113 + $0x5f0] sm:$0xff]
        %v328 = vld [vmem:[%s113 + $0x5f8] sm:$0xff]
        %v329 = vld [vmem:[%s113 + $0x600] sm:$0xff]
        %v330 = vld [vmem:[%s113 + $0x608] sm:$0xff]
        %v331 = vld [vmem:[%s113 + $0x610] sm:$0xff]
        %v332 = vld [vmem:[%s113 + $0x618] sm:$0xff]
        %v333 = vld [vmem:[%s113 + $0x620] sm:$0xff]
        %v334 = vld [vmem:[%s113 + $0x628] sm:$0xff]
        %v335 = vld [vmem:[%s113 + $0x630] sm:$0xff]
        %v336 = vld [vmem:[%s113 + $0x638] sm:$0xff]
        %v337 = vld [vmem:[%s113 + $0x640] sm:$0xff]
        %v338 = vld [vmem:[%s113 + $0x648] sm:$0xff]
        %v339 = vld [vmem:[%s113 + $0x650] sm:$0xff]
        %v340 = vld [vmem:[%s113 + $0x658] sm:$0xff]
        %v341 = vld [vmem:[%s113 + $0x660] sm:$0xff]
        %v342 = vld [vmem:[%s113 + $0x668] sm:$0xff]
        %v343 = vld [vmem:[%s113 + $0x670] sm:$0xff]
        %v344 = vld [vmem:[%s113 + $0x678] sm:$0xff]
        %v345 = vld [vmem:[%s113 + $0x680] sm:$0xff]
        %v346 = vld [vmem:[%s113 + $0x688] sm:$0xff]
        %v347 = vld [vmem:[%s113 + $0x690] sm:$0xff]
        %v348 = vld [vmem:[%s113 + $0x698] sm:$0xff]
        %v349 = vld [vmem:[%s113 + $0x6a0] sm:$0xff]
        %v350 = vld [vmem:[%s113 + $0x6a8] sm:$0xff]
        %v351 = vld [vmem:[%s113 + $0x6b0] sm:$0xff]
        %v352 = vld [vmem:[%s113 + $0x6b8] sm:$0xff]
        %v353 = vld [vmem:[%s113 + $0x6c0] sm:$0xff]
        %v354 = vld [vmem:[%s113 + $0x6c8] sm:$0xff]
        %v355 = vld [vmem:[%s113 + $0x6d0] sm:$0xff]
        %v356 = vld [vmem:[%s113 + $0x6d8] sm:$0xff]
        %v357 = vld [vmem:[%s113 + $0x6e0] sm:$0xff]
        %v358 = vld [vmem:[%s113 + $0x6e8] sm:$0xff]
        %v359 = vld [vmem:[%s113 + $0x6f0] sm:$0xff]
        %v360 = vld [vmem:[%s113 + $0x6f8] sm:$0xff]
        %v361 = vld [vmem:[%s113 + $0x700] sm:$0xff]
        %v362 = vld [vmem:[%s113 + $0x708] sm:$0xff]
        %v363 = vld [vmem:[%s113 + $0x710] sm:$0xff]
        %v364 = vld [vmem:[%s113 + $0x718] sm:$0xff]
        %v365 = vld [vmem:[%s113 + $0x720] sm:$0xff]
        %v366 = vld [vmem:[%s113 + $0x728] sm:$0xff]
        %v367 = vld [vmem:[%s113 + $0x730] sm:$0xff]
        %v368 = vld [vmem:[%s113 + $0x738] sm:$0xff]
        %v369 = vld [vmem:[%s113 + $0x740] sm:$0xff]
        %v370 = vld [vmem:[%s113 + $0x748] sm:$0xff]
        %v371 = vld [vmem:[%s113 + $0x750] sm:$0xff]
        %v372 = vld [vmem:[%s113 + $0x758] sm:$0xff]
        %v373 = vld [vmem:[%s113 + $0x760] sm:$0xff]
        %v374 = vld [vmem:[%s113 + $0x768] sm:$0xff]
        %v375 = vld [vmem:[%s113 + $0x770] sm:$0xff]
        %v376 = vld [vmem:[%s113 + $0x778] sm:$0xff]
        %v377 = vld [vmem:[%s113 + $0x780] sm:$0xff]
        %v378 = vld [vmem:[%s113 + $0x788] sm:$0xff]
        %v379 = vld [vmem:[%s113 + $0x790] sm:$0xff]
        %v380 = vld [vmem:[%s113 + $0x798] sm:$0xff]
        %v381 = vld [vmem:[%s113 + $0x7a0] sm:$0xff]
        %v382 = vld [vmem:[%s113 + $0x7a8] sm:$0xff]
        %v383 = vld [vmem:[%s113 + $0x7b0] sm:$0xff]
        %v384 = vld [vmem:[%s113 + $0x7b8] sm:$0xff]
        %v385 = vld [vmem:[%s113 + $0x7c0] sm:$0xff]
        %v386 = vld [vmem:[%s113 + $0x7c8] sm:$0xff]
        %v387 = vld [vmem:[%s113 + $0x7d0] sm:$0xff]
        %v388 = vld [vmem:[%s113 + $0x7d8] sm:$0xff]
        %v389 = vld [vmem:[%s113 + $0x7e0] sm:$0xff]
        %v390 = vld [vmem:[%s113 + $0x7e8] sm:$0xff]
        %v391 = vld [vmem:[%s113 + $0x7f0] sm:$0xff]
        %v392 = vld [vmem:[%s113 + $0x7f8] sm:$0xff]
        %v393 = vld [vmem:[%s113 + $0x800] sm:$0xff]
        %v394 = vld [vmem:[%s113 + $0x808] sm:$0xff]
        %v395 = vld [vmem:[%s113 + $0x810] sm:$0xff]
        %v396 = vld [vmem:[%s113 + $0x818] sm:$0xff]
        %v397 = vld [vmem:[%s113 + $0x820] sm:$0xff]
        %v398 = vld [vmem:[%s113 + $0x828] sm:$0xff]
        %v399 = vld [vmem:[%s113 + $0x830] sm:$0xff]
        %v400 = vld [vmem:[%s113 + $0x838] sm:$0xff]
        %v401 = vld [vmem:[%s113 + $0x840] sm:$0xff]
        %v402 = vld [vmem:[%s113 + $0x848] sm:$0xff]
        %v403 = vld [vmem:[%s113 + $0x850] sm:$0xff]
        %v404 = vld [vmem:[%s113 + $0x858] sm:$0xff]
        %v405 = vld [vmem:[%s113 + $0x860] sm:$0xff]
        %v406 = vld [vmem:[%s113 + $0x868] sm:$0xff]
        %v407 = vld [vmem:[%s113 + $0x870] sm:$0xff]
        %v408 = vld [vmem:[%s113 + $0x878] sm:$0xff]
        %v409 = vld [vmem:[%s113 + $0x880] sm:$0xff]
        %v410 = vld [vmem:[%s113 + $0x888] sm:$0xff]
        %v411 = vld [vmem:[%s113 + $0x890] sm:$0xff]
        %v412 = vld [vmem:[%s113 + $0x898] sm:$0xff]
        %v413 = vld [vmem:[%s113 + $0x8a0] sm:$0xff]
        %v414 = vld [vmem:[%s113 + $0x8a8] sm:$0xff]
        %v415 = vld [vmem:[%s113 + $0x8b0] sm:$0xff]
        %v416 = vld [vmem:[%s113 + $0x8b8] sm:$0xff]
        %v417 = vld [vmem:[%s113 + $0x8c0] sm:$0xff]
        %v418 = vld [vmem:[%s113 + $0x8c8] sm:$0xff]
        %v419 = vld [vmem:[%s113 + $0x8d0] sm:$0xff]
        %v420 = vld [vmem:[%s113 + $0x8d8] sm:$0xff]
        %v421 = vld [vmem:[%s113 + $0x8e0] sm:$0xff]
        %v422 = vld [vmem:[%s113 + $0x8e8] sm:$0xff]
        %v423 = vld [vmem:[%s113 + $0x8f0] sm:$0xff]
        %v424 = vld [vmem:[%s113 + $0x8f8] sm:$0xff]
        %v425 = vld [vmem:[%s113 + $0x900] sm:$0xff]
        %v426 = vld [vmem:[%s113 + $0x908] sm:$0xff]
        %v427 = vld [vmem:[%s113 + $0x910] sm:$0xff]
        %v428 = vld [vmem:[%s113 + $0x918] sm:$0xff]
        %v429 = vld [vmem:[%s113 + $0x920] sm:$0xff]
        %v430 = vld [vmem:[%s113 + $0x928] sm:$0xff]
        %v431 = vld [vmem:[%s113 + $0x930] sm:$0xff]
        %v432 = vld [vmem:[%s113 + $0x938] sm:$0xff]
        %v433 = vld [vmem:[%s113 + $0x940] sm:$0xff]
        %v434 = vld [vmem:[%s113 + $0x948] sm:$0xff]
        %v435 = vld [vmem:[%s113 + $0x950] sm:$0xff]
        %v436 = vld [vmem:[%s113 + $0x958] sm:$0xff]
        %v437 = vld [vmem:[%s113 + $0x960] sm:$0xff]
        %v438 = vld [vmem:[%s113 + $0x968] sm:$0xff]
        %v439 = vld [vmem:[%s113 + $0x970] sm:$0xff]
        %v440 = vld [vmem:[%s113 + $0x978] sm:$0xff]
        %v441 = vld [vmem:[%s113 + $0x980] sm:$0xff]
        %v442 = vld [vmem:[%s113 + $0x988] sm:$0xff]
        %v443 = vld [vmem:[%s113 + $0x990] sm:$0xff]
        %v444 = vld [vmem:[%s113 + $0x998] sm:$0xff]
        %v445 = vld [vmem:[%s113 + $0x9a0] sm:$0xff]
        %v446 = vld [vmem:[%s113 + $0x9a8] sm:$0xff]
        %v447 = vld [vmem:[%s113 + $0x9b0] sm:$0xff]
        %v448 = vld [vmem:[%s113 + $0x9b8] sm:$0xff]
        %v449 = vld [vmem:[%s113 + $0x9c0] sm:$0xff]
        %v450 = vld [vmem:[%s113 + $0x9c8] sm:$0xff]
        %v451 = vld [vmem:[%s113 + $0x9d0] sm:$0xff]
        %v452 = vld [vmem:[%s113 + $0x9d8] sm:$0xff]
        %v453 = vld [vmem:[%s113 + $0x9e0] sm:$0xff]
        %v454 = vld [vmem:[%s113 + $0x9e8] sm:$0xff]
        %v455 = vld [vmem:[%s113 + $0x9f0] sm:$0xff]
        %v456 = vld [vmem:[%s113 + $0x9f8] sm:$0xff]
        %v777 = vunpack.c.l.b16 %v137
        %v778 = vunpack.c.h.b16 %v137
        %v779 = vunpack.c.l.b16 %v138
        %v780 = vunpack.c.h.b16 %v138
        %v781 = vunpack.c.l.b16 %v139
        %v782 = vunpack.c.h.b16 %v139
        %v783 = vunpack.c.l.b16 %v140
        %v784 = vunpack.c.h.b16 %v140
        %v785 = vunpack.c.l.b16 %v141
        %v786 = vunpack.c.h.b16 %v141
        %v787 = vunpack.c.l.b16 %v142
        %v788 = vunpack.c.h.b16 %v142
        %v789 = vunpack.c.l.b16 %v143
        %v790 = vunpack.c.h.b16 %v143
        %v791 = vunpack.c.l.b16 %v144
        %v792 = vunpack.c.h.b16 %v144
        %v793 = vunpack.c.l.b16 %v145
        %v794 = vunpack.c.h.b16 %v145
        %v795 = vunpack.c.l.b16 %v146
        %v796 = vunpack.c.h.b16 %v146
        %v797 = vunpack.c.l.b16 %v147
        %v798 = vunpack.c.h.b16 %v147
        %v799 = vunpack.c.l.b16 %v148
        %v800 = vunpack.c.h.b16 %v148
        %v801 = vunpack.c.l.b16 %v149
        %v802 = vunpack.c.h.b16 %v149
        %v803 = vunpack.c.l.b16 %v150
        %v804 = vunpack.c.h.b16 %v150
        %v805 = vunpack.c.l.b16 %v151
        %v806 = vunpack.c.h.b16 %v151
        %v807 = vunpack.c.l.b16 %v152
        %v808 = vunpack.c.h.b16 %v152
        %v809 = vunpack.c.l.b16 %v153
        %v810 = vunpack.c.h.b16 %v153
        %v811 = vunpack.c.l.b16 %v154
        %v812 = vunpack.c.h.b16 %v154
        %v813 = vunpack.c.l.b16 %v155
        %v814 = vunpack.c.h.b16 %v155
        %v815 = vunpack.c.l.b16 %v156
        %v816 = vunpack.c.h.b16 %v156
        %v817 = vunpack.c.l.b16 %v157
        %v818 = vunpack.c.h.b16 %v157
        %v819 = vunpack.c.l.b16 %v158
        %v820 = vunpack.c.h.b16 %v158
        %v821 = vunpack.c.l.b16 %v159
        %v822 = vunpack.c.h.b16 %v159
        %v823 = vunpack.c.l.b16 %v160
        %v824 = vunpack.c.h.b16 %v160
        %v825 = vunpack.c.l.b16 %v161
        %v826 = vunpack.c.h.b16 %v161
        %v827 = vunpack.c.l.b16 %v162
        %v828 = vunpack.c.h.b16 %v162
        %v829 = vunpack.c.l.b16 %v163
        %v830 = vunpack.c.h.b16 %v163
        %v831 = vunpack.c.l.b16 %v164
        %v832 = vunpack.c.h.b16 %v164
        %v833 = vunpack.c.l.b16 %v165
        %v834 = vunpack.c.h.b16 %v165
        %v835 = vunpack.c.l.b16 %v166
        %v836 = vunpack.c.h.b16 %v166
        %v837 = vunpack.c.l.b16 %v167
        %v838 = vunpack.c.h.b16 %v167
        %v839 = vunpack.c.l.b16 %v168
        %v840 = vunpack.c.h.b16 %v168
        %v841 = vunpack.c.l.b16 %v169
        %v842 = vunpack.c.h.b16 %v169
        %v843 = vunpack.c.l.b16 %v170
        %v844 = vunpack.c.h.b16 %v170
        %v845 = vunpack.c.l.b16 %v171
        %v846 = vunpack.c.h.b16 %v171
        %v847 = vunpack.c.l.b16 %v172
        %v848 = vunpack.c.h.b16 %v172
        %v849 = vunpack.c.l.b16 %v173
        %v850 = vunpack.c.h.b16 %v173
        %v851 = vunpack.c.l.b16 %v174
        %v852 = vunpack.c.h.b16 %v174
        %v853 = vunpack.c.l.b16 %v175
        %v854 = vunpack.c.h.b16 %v175
        %v855 = vunpack.c.l.b16 %v176
        %v856 = vunpack.c.h.b16 %v176
        %v857 = vunpack.c.l.b16 %v177
        %v858 = vunpack.c.h.b16 %v177
        %v859 = vunpack.c.l.b16 %v178
        %v860 = vunpack.c.h.b16 %v178
        %v861 = vunpack.c.l.b16 %v179
        %v862 = vunpack.c.h.b16 %v179
        %v863 = vunpack.c.l.b16 %v180
        %v864 = vunpack.c.h.b16 %v180
        %v865 = vunpack.c.l.b16 %v181
        %v866 = vunpack.c.h.b16 %v181
        %v867 = vunpack.c.l.b16 %v182
        %v868 = vunpack.c.h.b16 %v182
        %v869 = vunpack.c.l.b16 %v183
        %v870 = vunpack.c.h.b16 %v183
        %v871 = vunpack.c.l.b16 %v184
        %v872 = vunpack.c.h.b16 %v184
        %v873 = vunpack.c.l.b16 %v185
        %v874 = vunpack.c.h.b16 %v185
        %v875 = vunpack.c.l.b16 %v186
        %v876 = vunpack.c.h.b16 %v186
        %v877 = vunpack.c.l.b16 %v187
        %v878 = vunpack.c.h.b16 %v187
        %v879 = vunpack.c.l.b16 %v188
        %v880 = vunpack.c.h.b16 %v188
        %v881 = vunpack.c.l.b16 %v189
        %v882 = vunpack.c.h.b16 %v189
        %v883 = vunpack.c.l.b16 %v190
        %v884 = vunpack.c.h.b16 %v190
        %v885 = vunpack.c.l.b16 %v191
        %v886 = vunpack.c.h.b16 %v191
        %v887 = vunpack.c.l.b16 %v192
        %v888 = vunpack.c.h.b16 %v192
        %v889 = vunpack.c.l.b16 %v193
        %v890 = vunpack.c.h.b16 %v193
        %v891 = vunpack.c.l.b16 %v194
        %v892 = vunpack.c.h.b16 %v194
        %v893 = vunpack.c.l.b16 %v195
        %v894 = vunpack.c.h.b16 %v195
        %v895 = vunpack.c.l.b16 %v196
        %v896 = vunpack.c.h.b16 %v196
        %v897 = vunpack.c.l.b16 %v197
        %v898 = vunpack.c.h.b16 %v197
        %v899 = vunpack.c.l.b16 %v198
        %v900 = vunpack.c.h.b16 %v198
        %v901 = vunpack.c.l.b16 %v199
        %v902 = vunpack.c.h.b16 %v199
        %v903 = vunpack.c.l.b16 %v200
        %v904 = vunpack.c.h.b16 %v200
        %v905 = vunpack.c.l.b16 %v201
        %v906 = vunpack.c.h.b16 %v201
        %v907 = vunpack.c.l.b16 %v202
        %v908 = vunpack.c.h.b16 %v202
        %v909 = vunpack.c.l.b16 %v203
        %v910 = vunpack.c.h.b16 %v203
        %v911 = vunpack.c.l.b16 %v204
        %v912 = vunpack.c.h.b16 %v204
        %v913 = vunpack.c.l.b16 %v205
        %v914 = vunpack.c.h.b16 %v205
        %v915 = vunpack.c.l.b16 %v206
        %v916 = vunpack.c.h.b16 %v206
        %v917 = vunpack.c.l.b16 %v207
        %v918 = vunpack.c.h.b16 %v207
        %v919 = vunpack.c.l.b16 %v208
        %v920 = vunpack.c.h.b16 %v208
        %v921 = vunpack.c.l.b16 %v209
        %v922 = vunpack.c.h.b16 %v209
        %v923 = vunpack.c.l.b16 %v210
        %v924 = vunpack.c.h.b16 %v210
        %v925 = vunpack.c.l.b16 %v211
        %v926 = vunpack.c.h.b16 %v211
        %v927 = vunpack.c.l.b16 %v212
        %v928 = vunpack.c.h.b16 %v212
        %v929 = vunpack.c.l.b16 %v213
        %v930 = vunpack.c.h.b16 %v213
        %v931 = vunpack.c.l.b16 %v214
        %v932 = vunpack.c.h.b16 %v214
        %v933 = vunpack.c.l.b16 %v215
        %v934 = vunpack.c.h.b16 %v215
        %v935 = vunpack.c.l.b16 %v216
        %v936 = vunpack.c.h.b16 %v216
        %v937 = vunpack.c.l.b16 %v217
        %v938 = vunpack.c.h.b16 %v217
        %v939 = vunpack.c.l.b16 %v218
        %v940 = vunpack.c.h.b16 %v218
        %v941 = vunpack.c.l.b16 %v219
        %v942 = vunpack.c.h.b16 %v219
        %v943 = vunpack.c.l.b16 %v220
        %v944 = vunpack.c.h.b16 %v220
        %v945 = vunpack.c.l.b16 %v221
        %v946 = vunpack.c.h.b16 %v221
        %v947 = vunpack.c.l.b16 %v222
        %v948 = vunpack.c.h.b16 %v222
        %v949 = vunpack.c.l.b16 %v223
        %v950 = vunpack.c.h.b16 %v223
        %v951 = vunpack.c.l.b16 %v224
        %v952 = vunpack.c.h.b16 %v224
        %v953 = vunpack.c.l.b16 %v225
        %v954 = vunpack.c.h.b16 %v225
        %v955 = vunpack.c.l.b16 %v226
        %v956 = vunpack.c.h.b16 %v226
        %v957 = vunpack.c.l.b16 %v227
        %v958 = vunpack.c.h.b16 %v227
        %v959 = vunpack.c.l.b16 %v228
        %v960 = vunpack.c.h.b16 %v228
        %v961 = vunpack.c.l.b16 %v229
        %v962 = vunpack.c.h.b16 %v229
        %v963 = vunpack.c.l.b16 %v230
        %v964 = vunpack.c.h.b16 %v230
        %v965 = vunpack.c.l.b16 %v231
        %v966 = vunpack.c.h.b16 %v231
        %v967 = vunpack.c.l.b16 %v232
        %v968 = vunpack.c.h.b16 %v232
        %v969 = vunpack.c.l.b16 %v233
        %v970 = vunpack.c.h.b16 %v233
        %v971 = vunpack.c.l.b16 %v234
        %v972 = vunpack.c.h.b16 %v234
        %v973 = vunpack.c.l.b16 %v235
        %v974 = vunpack.c.h.b16 %v235
        %v975 = vunpack.c.l.b16 %v236
        %v976 = vunpack.c.h.b16 %v236
        %v977 = vunpack.c.l.b16 %v237
        %v978 = vunpack.c.h.b16 %v237
        %v979 = vunpack.c.l.b16 %v238
        %v980 = vunpack.c.h.b16 %v238
        %v981 = vunpack.c.l.b16 %v239
        %v982 = vunpack.c.h.b16 %v239
        %v983 = vunpack.c.l.b16 %v240
        %v984 = vunpack.c.h.b16 %v240
        %v985 = vunpack.c.l.b16 %v241
        %v986 = vunpack.c.h.b16 %v241
        %v987 = vunpack.c.l.b16 %v242
        %v988 = vunpack.c.h.b16 %v242
        %v989 = vunpack.c.l.b16 %v243
        %v990 = vunpack.c.h.b16 %v243
        %v991 = vunpack.c.l.b16 %v244
        %v992 = vunpack.c.h.b16 %v244
        %v993 = vunpack.c.l.b16 %v245
        %v994 = vunpack.c.h.b16 %v245
        %v995 = vunpack.c.l.b16 %v246
        %v996 = vunpack.c.h.b16 %v246
        %v997 = vunpack.c.l.b16 %v247
        %v998 = vunpack.c.h.b16 %v247
        %v999 = vunpack.c.l.b16 %v248
        %v1000 = vunpack.c.h.b16 %v248
        %v1001 = vunpack.c.l.b16 %v249
        %v1002 = vunpack.c.h.b16 %v249
        %v1003 = vunpack.c.l.b16 %v250
        %v1004 = vunpack.c.h.b16 %v250
        %v1005 = vunpack.c.l.b16 %v251
        %v1006 = vunpack.c.h.b16 %v251
        %v1007 = vunpack.c.l.b16 %v252
        %v1008 = vunpack.c.h.b16 %v252
        %v1009 = vunpack.c.l.b16 %v253
        %v1010 = vunpack.c.h.b16 %v253
        %v1011 = vunpack.c.l.b16 %v254
        %v1012 = vunpack.c.h.b16 %v254
        %v1013 = vunpack.c.l.b16 %v255
        %v1014 = vunpack.c.h.b16 %v255
        %v1015 = vunpack.c.l.b16 %v256
        %v1016 = vunpack.c.h.b16 %v256
        %v1017 = vunpack.c.l.b16 %v257
        %v1018 = vunpack.c.h.b16 %v257
        %v1019 = vunpack.c.l.b16 %v258
        %v1020 = vunpack.c.h.b16 %v258
        %v1021 = vunpack.c.l.b16 %v259
        %v1022 = vunpack.c.h.b16 %v259
        %v1023 = vunpack.c.l.b16 %v260
        %v1024 = vunpack.c.h.b16 %v260
        %v1025 = vunpack.c.l.b16 %v261
        %v1026 = vunpack.c.h.b16 %v261
        %v1027 = vunpack.c.l.b16 %v262
        %v1028 = vunpack.c.h.b16 %v262
        %v1029 = vunpack.c.l.b16 %v263
        %v1030 = vunpack.c.h.b16 %v263
        %v1031 = vunpack.c.l.b16 %v264
        %v1032 = vunpack.c.h.b16 %v264
        %v1033 = vunpack.c.l.b16 %v265
        %v1034 = vunpack.c.h.b16 %v265
        %v1035 = vunpack.c.l.b16 %v266
        %v1036 = vunpack.c.h.b16 %v266
        %v1037 = vunpack.c.l.b16 %v267
        %v1038 = vunpack.c.h.b16 %v267
        %v1039 = vunpack.c.l.b16 %v268
        %v1040 = vunpack.c.h.b16 %v268
        %v1041 = vunpack.c.l.b16 %v269
        %v1042 = vunpack.c.h.b16 %v269
        %v1043 = vunpack.c.l.b16 %v270
        %v1044 = vunpack.c.h.b16 %v270
        %v1045 = vunpack.c.l.b16 %v271
        %v1046 = vunpack.c.h.b16 %v271
        %v1047 = vunpack.c.l.b16 %v272
        %v1048 = vunpack.c.h.b16 %v272
        %v1049 = vunpack.c.l.b16 %v273
        %v1050 = vunpack.c.h.b16 %v273
        %v1051 = vunpack.c.l.b16 %v274
        %v1052 = vunpack.c.h.b16 %v274
        %v1053 = vunpack.c.l.b16 %v275
        %v1054 = vunpack.c.h.b16 %v275
        %v1055 = vunpack.c.l.b16 %v276
        %v1056 = vunpack.c.h.b16 %v276
        %v1057 = vunpack.c.l.b16 %v277
        %v1058 = vunpack.c.h.b16 %v277
        %v1059 = vunpack.c.l.b16 %v278
        %v1060 = vunpack.c.h.b16 %v278
        %v1061 = vunpack.c.l.b16 %v279
        %v1062 = vunpack.c.h.b16 %v279
        %v1063 = vunpack.c.l.b16 %v280
        %v1064 = vunpack.c.h.b16 %v280
        %v1065 = vunpack.c.l.b16 %v281
        %v1066 = vunpack.c.h.b16 %v281
        %v1067 = vunpack.c.l.b16 %v282
        %v1068 = vunpack.c.h.b16 %v282
        %v1069 = vunpack.c.l.b16 %v283
        %v1070 = vunpack.c.h.b16 %v283
        %v1071 = vunpack.c.l.b16 %v284
        %v1072 = vunpack.c.h.b16 %v284
        %v1073 = vunpack.c.l.b16 %v285
        %v1074 = vunpack.c.h.b16 %v285
        %v1075 = vunpack.c.l.b16 %v286
        %v1076 = vunpack.c.h.b16 %v286
        %v1077 = vunpack.c.l.b16 %v287
        %v1078 = vunpack.c.h.b16 %v287
        %v1079 = vunpack.c.l.b16 %v288
        %v1080 = vunpack.c.h.b16 %v288
        %v1081 = vunpack.c.l.b16 %v289
        %v1082 = vunpack.c.h.b16 %v289
        %v1083 = vunpack.c.l.b16 %v290
        %v1084 = vunpack.c.h.b16 %v290
        %v1085 = vunpack.c.l.b16 %v291
        %v1086 = vunpack.c.h.b16 %v291
        %v1087 = vunpack.c.l.b16 %v292
        %v1088 = vunpack.c.h.b16 %v292
        %v1089 = vunpack.c.l.b16 %v293
        %v1090 = vunpack.c.h.b16 %v293
        %v1091 = vunpack.c.l.b16 %v294
        %v1092 = vunpack.c.h.b16 %v294
        %v1093 = vunpack.c.l.b16 %v295
        %v1094 = vunpack.c.h.b16 %v295
        %v1095 = vunpack.c.l.b16 %v296
        %v1096 = vunpack.c.h.b16 %v296
        %v1097 = vunpack.c.l.b16 %v297
        %v1098 = vunpack.c.h.b16 %v297
        %v1099 = vunpack.c.l.b16 %v298
        %v1100 = vunpack.c.h.b16 %v298
        %v1101 = vunpack.c.l.b16 %v299
        %v1102 = vunpack.c.h.b16 %v299
        %v1103 = vunpack.c.l.b16 %v300
        %v1104 = vunpack.c.h.b16 %v300
        %v1105 = vunpack.c.l.b16 %v301
        %v1106 = vunpack.c.h.b16 %v301
        %v1107 = vunpack.c.l.b16 %v302
        %v1108 = vunpack.c.h.b16 %v302
        %v1109 = vunpack.c.l.b16 %v303
        %v1110 = vunpack.c.h.b16 %v303
        %v1111 = vunpack.c.l.b16 %v304
        %v1112 = vunpack.c.h.b16 %v304
        %v1113 = vunpack.c.l.b16 %v305
        %v1114 = vunpack.c.h.b16 %v305
        %v1115 = vunpack.c.l.b16 %v306
        %v1116 = vunpack.c.h.b16 %v306
        %v1117 = vunpack.c.l.b16 %v307
        %v1118 = vunpack.c.h.b16 %v307
        %v1119 = vunpack.c.l.b16 %v308
        %v1120 = vunpack.c.h.b16 %v308
        %v1121 = vunpack.c.l.b16 %v309
        %v1122 = vunpack.c.h.b16 %v309
        %v1123 = vunpack.c.l.b16 %v310
        %v1124 = vunpack.c.h.b16 %v310
        %v1125 = vunpack.c.l.b16 %v311
        %v1126 = vunpack.c.h.b16 %v311
        %v1127 = vunpack.c.l.b16 %v312
        %v1128 = vunpack.c.h.b16 %v312
        %v1129 = vunpack.c.l.b16 %v313
        %v1130 = vunpack.c.h.b16 %v313
        %v1131 = vunpack.c.l.b16 %v314
        %v1132 = vunpack.c.h.b16 %v314
        %v1133 = vunpack.c.l.b16 %v315
        %v1134 = vunpack.c.h.b16 %v315
        %v1135 = vunpack.c.l.b16 %v316
        %v1136 = vunpack.c.h.b16 %v316
        %v1137 = vunpack.c.l.b16 %v317
        %v1138 = vunpack.c.h.b16 %v317
        %v1139 = vunpack.c.l.b16 %v318
        %v1140 = vunpack.c.h.b16 %v318
        %v1141 = vunpack.c.l.b16 %v319
        %v1142 = vunpack.c.h.b16 %v319
        %v1143 = vunpack.c.l.b16 %v320
        %v1144 = vunpack.c.h.b16 %v320
        %v1145 = vunpack.c.l.b16 %v321
        %v1146 = vunpack.c.h.b16 %v321
        %v1147 = vunpack.c.l.b16 %v322
        %v1148 = vunpack.c.h.b16 %v322
        %v1149 = vunpack.c.l.b16 %v323
        %v1150 = vunpack.c.h.b16 %v323
        %v1151 = vunpack.c.l.b16 %v324
        %v1152 = vunpack.c.h.b16 %v324
        %v1153 = vunpack.c.l.b16 %v325
        %v1154 = vunpack.c.h.b16 %v325
        %v1155 = vunpack.c.l.b16 %v326
        %v1156 = vunpack.c.h.b16 %v326
        %v1157 = vunpack.c.l.b16 %v327
        %v1158 = vunpack.c.h.b16 %v327
        %v1159 = vunpack.c.l.b16 %v328
        %v1160 = vunpack.c.h.b16 %v328
        %v1161 = vunpack.c.l.b16 %v329
        %v1162 = vunpack.c.h.b16 %v329
        %v1163 = vunpack.c.l.b16 %v330
        %v1164 = vunpack.c.h.b16 %v330
        %v1165 = vunpack.c.l.b16 %v331
        %v1166 = vunpack.c.h.b16 %v331
        %v1167 = vunpack.c.l.b16 %v332
        %v1168 = vunpack.c.h.b16 %v332
        %v1169 = vunpack.c.l.b16 %v333
        %v1170 = vunpack.c.h.b16 %v333
        %v1171 = vunpack.c.l.b16 %v334
        %v1172 = vunpack.c.h.b16 %v334
        %v1173 = vunpack.c.l.b16 %v335
        %v1174 = vunpack.c.h.b16 %v335
        %v1175 = vunpack.c.l.b16 %v336
        %v1176 = vunpack.c.h.b16 %v336
        %v1177 = vunpack.c.l.b16 %v337
        %v1178 = vunpack.c.h.b16 %v337
        %v1179 = vunpack.c.l.b16 %v338
        %v1180 = vunpack.c.h.b16 %v338
        %v1181 = vunpack.c.l.b16 %v339
        %v1182 = vunpack.c.h.b16 %v339
        %v1183 = vunpack.c.l.b16 %v340
        %v1184 = vunpack.c.h.b16 %v340
        %v1185 = vunpack.c.l.b16 %v341
        %v1186 = vunpack.c.h.b16 %v341
        %v1187 = vunpack.c.l.b16 %v342
        %v1188 = vunpack.c.h.b16 %v342
        %v1189 = vunpack.c.l.b16 %v343
        %v1190 = vunpack.c.h.b16 %v343
        %v1191 = vunpack.c.l.b16 %v344
        %v1192 = vunpack.c.h.b16 %v344
        %v1193 = vunpack.c.l.b16 %v345
        %v1194 = vunpack.c.h.b16 %v345
        %v1195 = vunpack.c.l.b16 %v346
        %v1196 = vunpack.c.h.b16 %v346
        %v1197 = vunpack.c.l.b16 %v347
        %v1198 = vunpack.c.h.b16 %v347
        %v1199 = vunpack.c.l.b16 %v348
        %v1200 = vunpack.c.h.b16 %v348
        %v1201 = vunpack.c.l.b16 %v349
        %v1202 = vunpack.c.h.b16 %v349
        %v1203 = vunpack.c.l.b16 %v350
        %v1204 = vunpack.c.h.b16 %v350
        %v1205 = vunpack.c.l.b16 %v351
        %v1206 = vunpack.c.h.b16 %v351
        %v1207 = vunpack.c.l.b16 %v352
        %v1208 = vunpack.c.h.b16 %v352
        %v1209 = vunpack.c.l.b16 %v353
        %v1210 = vunpack.c.h.b16 %v353
        %v1211 = vunpack.c.l.b16 %v354
        %v1212 = vunpack.c.h.b16 %v354
        %v1213 = vunpack.c.l.b16 %v355
        %v1214 = vunpack.c.h.b16 %v355
        %v1215 = vunpack.c.l.b16 %v356
        %v1216 = vunpack.c.h.b16 %v356
        %v1217 = vunpack.c.l.b16 %v357
        %v1218 = vunpack.c.h.b16 %v357
        %v1219 = vunpack.c.l.b16 %v358
        %v1220 = vunpack.c.h.b16 %v358
        %v1221 = vunpack.c.l.b16 %v359
        %v1222 = vunpack.c.h.b16 %v359
        %v1223 = vunpack.c.l.b16 %v360
        %v1224 = vunpack.c.h.b16 %v360
        %v1225 = vunpack.c.l.b16 %v361
        %v1226 = vunpack.c.h.b16 %v361
        %v1227 = vunpack.c.l.b16 %v362
        %v1228 = vunpack.c.h.b16 %v362
        %v1229 = vunpack.c.l.b16 %v363
        %v1230 = vunpack.c.h.b16 %v363
        %v1231 = vunpack.c.l.b16 %v364
        %v1232 = vunpack.c.h.b16 %v364
        %v1233 = vunpack.c.l.b16 %v365
        %v1234 = vunpack.c.h.b16 %v365
        %v1235 = vunpack.c.l.b16 %v366
        %v1236 = vunpack.c.h.b16 %v366
        %v1237 = vunpack.c.l.b16 %v367
        %v1238 = vunpack.c.h.b16 %v367
        %v1239 = vunpack.c.l.b16 %v368
        %v1240 = vunpack.c.h.b16 %v368
        %v1241 = vunpack.c.l.b16 %v369
        %v1242 = vunpack.c.h.b16 %v369
        %v1243 = vunpack.c.l.b16 %v370
        %v1244 = vunpack.c.h.b16 %v370
        %v1245 = vunpack.c.l.b16 %v371
        %v1246 = vunpack.c.h.b16 %v371
        %v1247 = vunpack.c.l.b16 %v372
        %v1248 = vunpack.c.h.b16 %v372
        %v1249 = vunpack.c.l.b16 %v373
        %v1250 = vunpack.c.h.b16 %v373
        %v1251 = vunpack.c.l.b16 %v374
        %v1252 = vunpack.c.h.b16 %v374
        %v1253 = vunpack.c.l.b16 %v375
        %v1254 = vunpack.c.h.b16 %v375
        %v1255 = vunpack.c.l.b16 %v376
        %v1256 = vunpack.c.h.b16 %v376
        %v1257 = vunpack.c.l.b16 %v377
        %v1258 = vunpack.c.h.b16 %v377
        %v1259 = vunpack.c.l.b16 %v378
        %v1260 = vunpack.c.h.b16 %v378
        %v1261 = vunpack.c.l.b16 %v379
        %v1262 = vunpack.c.h.b16 %v379
        %v1263 = vunpack.c.l.b16 %v380
        %v1264 = vunpack.c.h.b16 %v380
        %v1265 = vunpack.c.l.b16 %v381
        %v1266 = vunpack.c.h.b16 %v381
        %v1267 = vunpack.c.l.b16 %v382
        %v1268 = vunpack.c.h.b16 %v382
        %v1269 = vunpack.c.l.b16 %v383
        %v1270 = vunpack.c.h.b16 %v383
        %v1271 = vunpack.c.l.b16 %v384
        %v1272 = vunpack.c.h.b16 %v384
        %v1273 = vunpack.c.l.b16 %v385
        %v1274 = vunpack.c.h.b16 %v385
        %v1275 = vunpack.c.l.b16 %v386
        %v1276 = vunpack.c.h.b16 %v386
        %v1277 = vunpack.c.l.b16 %v387
        %v1278 = vunpack.c.h.b16 %v387
        %v1279 = vunpack.c.l.b16 %v388
        %v1280 = vunpack.c.h.b16 %v388
        %v1281 = vunpack.c.l.b16 %v389
        %v1282 = vunpack.c.h.b16 %v389
        %v1283 = vunpack.c.l.b16 %v390
        %v1284 = vunpack.c.h.b16 %v390
        %v1285 = vunpack.c.l.b16 %v391
        %v1286 = vunpack.c.h.b16 %v391
        %v1287 = vunpack.c.l.b16 %v392
        %v1288 = vunpack.c.h.b16 %v392
        %v1289 = vunpack.c.l.b16 %v393
        %v1290 = vunpack.c.h.b16 %v393
        %v1291 = vunpack.c.l.b16 %v394
        %v1292 = vunpack.c.h.b16 %v394
        %v1293 = vunpack.c.l.b16 %v395
        %v1294 = vunpack.c.h.b16 %v395
        %v1295 = vunpack.c.l.b16 %v396
        %v1296 = vunpack.c.h.b16 %v396
        %v1297 = vunpack.c.l.b16 %v397
        %v1298 = vunpack.c.h.b16 %v397
        %v1299 = vunpack.c.l.b16 %v398
        %v1300 = vunpack.c.h.b16 %v398
        %v1301 = vunpack.c.l.b16 %v399
        %v1302 = vunpack.c.h.b16 %v399
        %v1303 = vunpack.c.l.b16 %v400
        %v1304 = vunpack.c.h.b16 %v400
        %v1305 = vunpack.c.l.b16 %v401
        %v1306 = vunpack.c.h.b16 %v401
        %v1307 = vunpack.c.l.b16 %v402
        %v1308 = vunpack.c.h.b16 %v402
        %v1309 = vunpack.c.l.b16 %v403
        %v1310 = vunpack.c.h.b16 %v403
        %v1311 = vunpack.c.l.b16 %v404
        %v1312 = vunpack.c.h.b16 %v404
        %v1313 = vunpack.c.l.b16 %v405
        %v1314 = vunpack.c.h.b16 %v405
        %v1315 = vunpack.c.l.b16 %v406
        %v1316 = vunpack.c.h.b16 %v406
        %v1317 = vunpack.c.l.b16 %v407
        %v1318 = vunpack.c.h.b16 %v407
        %v1319 = vunpack.c.l.b16 %v408
        %v1320 = vunpack.c.h.b16 %v408
        %v1321 = vunpack.c.l.b16 %v409
        %v1322 = vunpack.c.h.b16 %v409
        %v1323 = vunpack.c.l.b16 %v410
        %v1324 = vunpack.c.h.b16 %v410
        %v1325 = vunpack.c.l.b16 %v411
        %v1326 = vunpack.c.h.b16 %v411
        %v1327 = vunpack.c.l.b16 %v412
        %v1328 = vunpack.c.h.b16 %v412
        %v1329 = vunpack.c.l.b16 %v413
        %v1330 = vunpack.c.h.b16 %v413
        %v1331 = vunpack.c.l.b16 %v414
        %v1332 = vunpack.c.h.b16 %v414
        %v1333 = vunpack.c.l.b16 %v415
        %v1334 = vunpack.c.h.b16 %v415
        %v1335 = vunpack.c.l.b16 %v416
        %v1336 = vunpack.c.h.b16 %v416
        %v1337 = vunpack.c.l.b16 %v417
        %v1338 = vunpack.c.h.b16 %v417
        %v1339 = vunpack.c.l.b16 %v418
        %v1340 = vunpack.c.h.b16 %v418
        %v1341 = vunpack.c.l.b16 %v419
        %v1342 = vunpack.c.h.b16 %v419
        %v1343 = vunpack.c.l.b16 %v420
        %v1344 = vunpack.c.h.b16 %v420
        %v1345 = vunpack.c.l.b16 %v421
        %v1346 = vunpack.c.h.b16 %v421
        %v1347 = vunpack.c.l.b16 %v422
        %v1348 = vunpack.c.h.b16 %v422
        %v1349 = vunpack.c.l.b16 %v423
        %v1350 = vunpack.c.h.b16 %v423
        %v1351 = vunpack.c.l.b16 %v424
        %v1352 = vunpack.c.h.b16 %v424
        %v1353 = vunpack.c.l.b16 %v425
        %v1354 = vunpack.c.h.b16 %v425
        %v1355 = vunpack.c.l.b16 %v426
        %v1356 = vunpack.c.h.b16 %v426
        %v1357 = vunpack.c.l.b16 %v427
        %v1358 = vunpack.c.h.b16 %v427
        %v1359 = vunpack.c.l.b16 %v428
        %v1360 = vunpack.c.h.b16 %v428
        %v1361 = vunpack.c.l.b16 %v429
        %v1362 = vunpack.c.h.b16 %v429
        %v1363 = vunpack.c.l.b16 %v430
        %v1364 = vunpack.c.h.b16 %v430
        %v1365 = vunpack.c.l.b16 %v431
        %v1366 = vunpack.c.h.b16 %v431
        %v1367 = vunpack.c.l.b16 %v432
        %v1368 = vunpack.c.h.b16 %v432
        %v1369 = vunpack.c.l.b16 %v433
        %v1370 = vunpack.c.h.b16 %v433
        %v1371 = vunpack.c.l.b16 %v434
        %v1372 = vunpack.c.h.b16 %v434
        %v1373 = vunpack.c.l.b16 %v435
        %v1374 = vunpack.c.h.b16 %v435
        %v1375 = vunpack.c.l.b16 %v436
        %v1376 = vunpack.c.h.b16 %v436
        %v1377 = vunpack.c.l.b16 %v437
        %v1378 = vunpack.c.h.b16 %v437
        %v1379 = vunpack.c.l.b16 %v438
        %v1380 = vunpack.c.h.b16 %v438
        %v1381 = vunpack.c.l.b16 %v439
        %v1382 = vunpack.c.h.b16 %v439
        %v1383 = vunpack.c.l.b16 %v440
        %v1384 = vunpack.c.h.b16 %v440
        %v1385 = vunpack.c.l.b16 %v441
        %v1386 = vunpack.c.h.b16 %v441
        %v1387 = vunpack.c.l.b16 %v442
        %v1388 = vunpack.c.h.b16 %v442
        %v1389 = vunpack.c.l.b16 %v443
        %v1390 = vunpack.c.h.b16 %v443
        %v1391 = vunpack.c.l.b16 %v444
        %v1392 = vunpack.c.h.b16 %v444
        %v1393 = vunpack.c.l.b16 %v445
        %v1394 = vunpack.c.h.b16 %v445
        %v1395 = vunpack.c.l.b16 %v446
        %v1396 = vunpack.c.h.b16 %v446
        %v1397 = vunpack.c.l.b16 %v447
        %v1398 = vunpack.c.h.b16 %v447
        %v1399 = vunpack.c.l.b16 %v448
        %v1400 = vunpack.c.h.b16 %v448
        %v1401 = vunpack.c.l.b16 %v449
        %v1402 = vunpack.c.h.b16 %v449
        %v1403 = vunpack.c.l.b16 %v450
        %v1404 = vunpack.c.h.b16 %v450
        %v1405 = vunpack.c.l.b16 %v451
        %v1406 = vunpack.c.h.b16 %v451
        %v1407 = vunpack.c.l.b16 %v452
        %v1408 = vunpack.c.h.b16 %v452
        %v1409 = vunpack.c.l.b16 %v453
        %v1410 = vunpack.c.h.b16 %v453
        %v1411 = vunpack.c.l.b16 %v454
        %v1412 = vunpack.c.h.b16 %v454
        %v1413 = vunpack.c.l.b16 %v455
        %v1414 = vunpack.c.h.b16 %v455
        %v1415 = vunpack.c.l.b16 %v456
        %v1416 = vunpack.c.h.b16 %v456
        %v1417 = vpack.c.b16 %v781, %v777
        %v1418 = vpack.c.b16 %v782, %v778
        %v1419 = vpack.c.b16 %v783, %v779
        %v1420 = vpack.c.b16 %v784, %v780
        %v1421 = vpack.c.b16 %v789, %v785
        %v1422 = vpack.c.b16 %v790, %v786
        %v1423 = vpack.c.b16 %v791, %v787
        %v1424 = vpack.c.b16 %v792, %v788
        %v1425 = vpack.c.b16 %v797, %v793
        %v1426 = vpack.c.b16 %v798, %v794
        %v1427 = vpack.c.b16 %v799, %v795
        %v1428 = vpack.c.b16 %v800, %v796
        %v1429 = vpack.c.b16 %v805, %v801
        %v1430 = vpack.c.b16 %v806, %v802
        %v1431 = vpack.c.b16 %v807, %v803
        %v1432 = vpack.c.b16 %v808, %v804
        %v1433 = vpack.c.b16 %v813, %v809
        %v1434 = vpack.c.b16 %v814, %v810
        %v1435 = vpack.c.b16 %v815, %v811
        %v1436 = vpack.c.b16 %v816, %v812
        %v1437 = vpack.c.b16 %v821, %v817
        %v1438 = vpack.c.b16 %v822, %v818
        %v1439 = vpack.c.b16 %v823, %v819
        %v1440 = vpack.c.b16 %v824, %v820
        %v1441 = vpack.c.b16 %v829, %v825
        %v1442 = vpack.c.b16 %v830, %v826
        %v1443 = vpack.c.b16 %v831, %v827
        %v1444 = vpack.c.b16 %v832, %v828
        %v1445 = vpack.c.b16 %v837, %v833
        %v1446 = vpack.c.b16 %v838, %v834
        %v1447 = vpack.c.b16 %v839, %v835
        %v1448 = vpack.c.b16 %v840, %v836
        %v1449 = vpack.c.b16 %v845, %v841
        %v1450 = vpack.c.b16 %v846, %v842
        %v1451 = vpack.c.b16 %v847, %v843
        %v1452 = vpack.c.b16 %v848, %v844
        %v1453 = vpack.c.b16 %v853, %v849
        %v1454 = vpack.c.b16 %v854, %v850
        %v1455 = vpack.c.b16 %v855, %v851
        %v1456 = vpack.c.b16 %v856, %v852
        %v1457 = vpack.c.b16 %v861, %v857
        %v1458 = vpack.c.b16 %v862, %v858
        %v1459 = vpack.c.b16 %v863, %v859
        %v1460 = vpack.c.b16 %v864, %v860
        %v1461 = vpack.c.b16 %v869, %v865
        %v1462 = vpack.c.b16 %v870, %v866
        %v1463 = vpack.c.b16 %v871, %v867
        %v1464 = vpack.c.b16 %v872, %v868
        %v1465 = vpack.c.b16 %v877, %v873
        %v1466 = vpack.c.b16 %v878, %v874
        %v1467 = vpack.c.b16 %v879, %v875
        %v1468 = vpack.c.b16 %v880, %v876
        %v1469 = vpack.c.b16 %v885, %v881
        %v1470 = vpack.c.b16 %v886, %v882
        %v1471 = vpack.c.b16 %v887, %v883
        %v1472 = vpack.c.b16 %v888, %v884
        %v1473 = vpack.c.b16 %v893, %v889
        %v1474 = vpack.c.b16 %v894, %v890
        %v1475 = vpack.c.b16 %v895, %v891
        %v1476 = vpack.c.b16 %v896, %v892
        %v1477 = vpack.c.b16 %v901, %v897
        %v1478 = vpack.c.b16 %v902, %v898
        %v1479 = vpack.c.b16 %v903, %v899
        %v1480 = vpack.c.b16 %v904, %v900
        %v1481 = vpack.c.b16 %v909, %v905
        %v1482 = vpack.c.b16 %v910, %v906
        %v1483 = vpack.c.b16 %v911, %v907
        %v1484 = vpack.c.b16 %v912, %v908
        %v1485 = vpack.c.b16 %v917, %v913
        %v1486 = vpack.c.b16 %v918, %v914
        %v1487 = vpack.c.b16 %v919, %v915
        %v1488 = vpack.c.b16 %v920, %v916
        %v1489 = vpack.c.b16 %v925, %v921
        %v1490 = vpack.c.b16 %v926, %v922
        %v1491 = vpack.c.b16 %v927, %v923
        %v1492 = vpack.c.b16 %v928, %v924
        %v1493 = vpack.c.b16 %v933, %v929
        %v1494 = vpack.c.b16 %v934, %v930
        %v1495 = vpack.c.b16 %v935, %v931
        %v1496 = vpack.c.b16 %v936, %v932
        %v1497 = vpack.c.b16 %v941, %v937
        %v1498 = vpack.c.b16 %v942, %v938
        %v1499 = vpack.c.b16 %v943, %v939
        %v1500 = vpack.c.b16 %v944, %v940
        %v1501 = vpack.c.b16 %v949, %v945
        %v1502 = vpack.c.b16 %v950, %v946
        %v1503 = vpack.c.b16 %v951, %v947
        %v1504 = vpack.c.b16 %v952, %v948
        %v1505 = vpack.c.b16 %v957, %v953
        %v1506 = vpack.c.b16 %v958, %v954
        %v1507 = vpack.c.b16 %v959, %v955
        %v1508 = vpack.c.b16 %v960, %v956
        %v1509 = vpack.c.b16 %v965, %v961
        %v1510 = vpack.c.b16 %v966, %v962
        %v1511 = vpack.c.b16 %v967, %v963
        %v1512 = vpack.c.b16 %v968, %v964
        %v1513 = vpack.c.b16 %v973, %v969
        %v1514 = vpack.c.b16 %v974, %v970
        %v1515 = vpack.c.b16 %v975, %v971
        %v1516 = vpack.c.b16 %v976, %v972
        %v1517 = vpack.c.b16 %v981, %v977
        %v1518 = vpack.c.b16 %v982, %v978
        %v1519 = vpack.c.b16 %v983, %v979
        %v1520 = vpack.c.b16 %v984, %v980
        %v1521 = vpack.c.b16 %v989, %v985
        %v1522 = vpack.c.b16 %v990, %v986
        %v1523 = vpack.c.b16 %v991, %v987
        %v1524 = vpack.c.b16 %v992, %v988
        %v1525 = vpack.c.b16 %v997, %v993
        %v1526 = vpack.c.b16 %v998, %v994
        %v1527 = vpack.c.b16 %v999, %v995
        %v1528 = vpack.c.b16 %v1000, %v996
        %v1529 = vpack.c.b16 %v1005, %v1001
        %v1530 = vpack.c.b16 %v1006, %v1002
        %v1531 = vpack.c.b16 %v1007, %v1003
        %v1532 = vpack.c.b16 %v1008, %v1004
        %v1533 = vpack.c.b16 %v1013, %v1009
        %v1534 = vpack.c.b16 %v1014, %v1010
        %v1535 = vpack.c.b16 %v1015, %v1011
        %v1536 = vpack.c.b16 %v1016, %v1012
        %v1537 = vpack.c.b16 %v1021, %v1017
        %v1538 = vpack.c.b16 %v1022, %v1018
        %v1539 = vpack.c.b16 %v1023, %v1019
        %v1540 = vpack.c.b16 %v1024, %v1020
        %v1541 = vpack.c.b16 %v1029, %v1025
        %v1542 = vpack.c.b16 %v1030, %v1026
        %v1543 = vpack.c.b16 %v1031, %v1027
        %v1544 = vpack.c.b16 %v1032, %v1028
        %v1545 = vpack.c.b16 %v1037, %v1033
        %v1546 = vpack.c.b16 %v1038, %v1034
        %v1547 = vpack.c.b16 %v1039, %v1035
        %v1548 = vpack.c.b16 %v1040, %v1036
        %v1549 = vpack.c.b16 %v1045, %v1041
        %v1550 = vpack.c.b16 %v1046, %v1042
        %v1551 = vpack.c.b16 %v1047, %v1043
        %v1552 = vpack.c.b16 %v1048, %v1044
        %v1553 = vpack.c.b16 %v1053, %v1049
        %v1554 = vpack.c.b16 %v1054, %v1050
        %v1555 = vpack.c.b16 %v1055, %v1051
        %v1556 = vpack.c.b16 %v1056, %v1052
        %v1557 = vpack.c.b16 %v1061, %v1057
        %v1558 = vpack.c.b16 %v1062, %v1058
        %v1559 = vpack.c.b16 %v1063, %v1059
        %v1560 = vpack.c.b16 %v1064, %v1060
        %v1561 = vpack.c.b16 %v1069, %v1065
        %v1562 = vpack.c.b16 %v1070, %v1066
        %v1563 = vpack.c.b16 %v1071, %v1067
        %v1564 = vpack.c.b16 %v1072, %v1068
        %v1565 = vpack.c.b16 %v1077, %v1073
        %v1566 = vpack.c.b16 %v1078, %v1074
        %v1567 = vpack.c.b16 %v1079, %v1075
        %v1568 = vpack.c.b16 %v1080, %v1076
        %v1569 = vpack.c.b16 %v1085, %v1081
        %v1570 = vpack.c.b16 %v1086, %v1082
        %v1571 = vpack.c.b16 %v1087, %v1083
        %v1572 = vpack.c.b16 %v1088, %v1084
        %v1573 = vpack.c.b16 %v1093, %v1089
        %v1574 = vpack.c.b16 %v1094, %v1090
        %v1575 = vpack.c.b16 %v1095, %v1091
        %v1576 = vpack.c.b16 %v1096, %v1092
        %v1577 = vpack.c.b16 %v1101, %v1097
        %v1578 = vpack.c.b16 %v1102, %v1098
        %v1579 = vpack.c.b16 %v1103, %v1099
        %v1580 = vpack.c.b16 %v1104, %v1100
        %v1581 = vpack.c.b16 %v1109, %v1105
        %v1582 = vpack.c.b16 %v1110, %v1106
        %v1583 = vpack.c.b16 %v1111, %v1107
        %v1584 = vpack.c.b16 %v1112, %v1108
        %v1585 = vpack.c.b16 %v1117, %v1113
        %v1586 = vpack.c.b16 %v1118, %v1114
        %v1587 = vpack.c.b16 %v1119, %v1115
        %v1588 = vpack.c.b16 %v1120, %v1116
        %v1589 = vpack.c.b16 %v1125, %v1121
        %v1590 = vpack.c.b16 %v1126, %v1122
        %v1591 = vpack.c.b16 %v1127, %v1123
        %v1592 = vpack.c.b16 %v1128, %v1124
        %v1593 = vpack.c.b16 %v1133, %v1129
        %v1594 = vpack.c.b16 %v1134, %v1130
        %v1595 = vpack.c.b16 %v1135, %v1131
        %v1596 = vpack.c.b16 %v1136, %v1132
        %v1597 = vpack.c.b16 %v1141, %v1137
        %v1598 = vpack.c.b16 %v1142, %v1138
        %v1599 = vpack.c.b16 %v1143, %v1139
        %v1600 = vpack.c.b16 %v1144, %v1140
        %v1601 = vpack.c.b16 %v1149, %v1145
        %v1602 = vpack.c.b16 %v1150, %v1146
        %v1603 = vpack.c.b16 %v1151, %v1147
        %v1604 = vpack.c.b16 %v1152, %v1148
        %v1605 = vpack.c.b16 %v1157, %v1153
        %v1606 = vpack.c.b16 %v1158, %v1154
        %v1607 = vpack.c.b16 %v1159, %v1155
        %v1608 = vpack.c.b16 %v1160, %v1156
        %v1609 = vpack.c.b16 %v1165, %v1161
        %v1610 = vpack.c.b16 %v1166, %v1162
        %v1611 = vpack.c.b16 %v1167, %v1163
        %v1612 = vpack.c.b16 %v1168, %v1164
        %v1613 = vpack.c.b16 %v1173, %v1169
        %v1614 = vpack.c.b16 %v1174, %v1170
        %v1615 = vpack.c.b16 %v1175, %v1171
        %v1616 = vpack.c.b16 %v1176, %v1172
        %v1617 = vpack.c.b16 %v1181, %v1177
        %v1618 = vpack.c.b16 %v1182, %v1178
        %v1619 = vpack.c.b16 %v1183, %v1179
        %v1620 = vpack.c.b16 %v1184, %v1180
        %v1621 = vpack.c.b16 %v1189, %v1185
        %v1622 = vpack.c.b16 %v1190, %v1186
        %v1623 = vpack.c.b16 %v1191, %v1187
        %v1624 = vpack.c.b16 %v1192, %v1188
        %v1625 = vpack.c.b16 %v1197, %v1193
        %v1626 = vpack.c.b16 %v1198, %v1194
        %v1627 = vpack.c.b16 %v1199, %v1195
        %v1628 = vpack.c.b16 %v1200, %v1196
        %v1629 = vpack.c.b16 %v1205, %v1201
        %v1630 = vpack.c.b16 %v1206, %v1202
        %v1631 = vpack.c.b16 %v1207, %v1203
        %v1632 = vpack.c.b16 %v1208, %v1204
        %v1633 = vpack.c.b16 %v1213, %v1209
        %v1634 = vpack.c.b16 %v1214, %v1210
        %v1635 = vpack.c.b16 %v1215, %v1211
        %v1636 = vpack.c.b16 %v1216, %v1212
        %v1637 = vpack.c.b16 %v1221, %v1217
        %v1638 = vpack.c.b16 %v1222, %v1218
        %v1639 = vpack.c.b16 %v1223, %v1219
        %v1640 = vpack.c.b16 %v1224, %v1220
        %v1641 = vpack.c.b16 %v1229, %v1225
        %v1642 = vpack.c.b16 %v1230, %v1226
        %v1643 = vpack.c.b16 %v1231, %v1227
        %v1644 = vpack.c.b16 %v1232, %v1228
        %v1645 = vpack.c.b16 %v1237, %v1233
        %v1646 = vpack.c.b16 %v1238, %v1234
        %v1647 = vpack.c.b16 %v1239, %v1235
        %v1648 = vpack.c.b16 %v1240, %v1236
        %v1649 = vpack.c.b16 %v1245, %v1241
        %v1650 = vpack.c.b16 %v1246, %v1242
        %v1651 = vpack.c.b16 %v1247, %v1243
        %v1652 = vpack.c.b16 %v1248, %v1244
        %v1653 = vpack.c.b16 %v1253, %v1249
        %v1654 = vpack.c.b16 %v1254, %v1250
        %v1655 = vpack.c.b16 %v1255, %v1251
        %v1656 = vpack.c.b16 %v1256, %v1252
        %v1657 = vpack.c.b16 %v1261, %v1257
        %v1658 = vpack.c.b16 %v1262, %v1258
        %v1659 = vpack.c.b16 %v1263, %v1259
        %v1660 = vpack.c.b16 %v1264, %v1260
        %v1661 = vpack.c.b16 %v1269, %v1265
        %v1662 = vpack.c.b16 %v1270, %v1266
        %v1663 = vpack.c.b16 %v1271, %v1267
        %v1664 = vpack.c.b16 %v1272, %v1268
        %v1665 = vpack.c.b16 %v1277, %v1273
        %v1666 = vpack.c.b16 %v1278, %v1274
        %v1667 = vpack.c.b16 %v1279, %v1275
        %v1668 = vpack.c.b16 %v1280, %v1276
        %v1669 = vpack.c.b16 %v1285, %v1281
        %v1670 = vpack.c.b16 %v1286, %v1282
        %v1671 = vpack.c.b16 %v1287, %v1283
        %v1672 = vpack.c.b16 %v1288, %v1284
        %v1673 = vpack.c.b16 %v1293, %v1289
        %v1674 = vpack.c.b16 %v1294, %v1290
        %v1675 = vpack.c.b16 %v1295, %v1291
        %v1676 = vpack.c.b16 %v1296, %v1292
        %v1677 = vpack.c.b16 %v1301, %v1297
        %v1678 = vpack.c.b16 %v1302, %v1298
        %v1679 = vpack.c.b16 %v1303, %v1299
        %v1680 = vpack.c.b16 %v1304, %v1300
        %v1681 = vpack.c.b16 %v1309, %v1305
        %v1682 = vpack.c.b16 %v1310, %v1306
        %v1683 = vpack.c.b16 %v1311, %v1307
        %v1684 = vpack.c.b16 %v1312, %v1308
        %v1685 = vpack.c.b16 %v1317, %v1313
        %v1686 = vpack.c.b16 %v1318, %v1314
        %v1687 = vpack.c.b16 %v1319, %v1315
        %v1688 = vpack.c.b16 %v1320, %v1316
        %v1689 = vpack.c.b16 %v1325, %v1321
        %v1690 = vpack.c.b16 %v1326, %v1322
        %v1691 = vpack.c.b16 %v1327, %v1323
        %v1692 = vpack.c.b16 %v1328, %v1324
        %v1693 = vpack.c.b16 %v1333, %v1329
        %v1694 = vpack.c.b16 %v1334, %v1330
        %v1695 = vpack.c.b16 %v1335, %v1331
        %v1696 = vpack.c.b16 %v1336, %v1332
        %v1697 = vpack.c.b16 %v1341, %v1337
        %v1698 = vpack.c.b16 %v1342, %v1338
        %v1699 = vpack.c.b16 %v1343, %v1339
        %v1700 = vpack.c.b16 %v1344, %v1340
        %v1701 = vpack.c.b16 %v1349, %v1345
        %v1702 = vpack.c.b16 %v1350, %v1346
        %v1703 = vpack.c.b16 %v1351, %v1347
        %v1704 = vpack.c.b16 %v1352, %v1348
        %v1705 = vpack.c.b16 %v1357, %v1353
        %v1706 = vpack.c.b16 %v1358, %v1354
        %v1707 = vpack.c.b16 %v1359, %v1355
        %v1708 = vpack.c.b16 %v1360, %v1356
        %v1709 = vpack.c.b16 %v1365, %v1361
        %v1710 = vpack.c.b16 %v1366, %v1362
        %v1711 = vpack.c.b16 %v1367, %v1363
        %v1712 = vpack.c.b16 %v1368, %v1364
        %v1713 = vpack.c.b16 %v1373, %v1369
        %v1714 = vpack.c.b16 %v1374, %v1370
        %v1715 = vpack.c.b16 %v1375, %v1371
        %v1716 = vpack.c.b16 %v1376, %v1372
        %v1717 = vpack.c.b16 %v1381, %v1377
        %v1718 = vpack.c.b16 %v1382, %v1378
        %v1719 = vpack.c.b16 %v1383, %v1379
        %v1720 = vpack.c.b16 %v1384, %v1380
        %v1721 = vpack.c.b16 %v1389, %v1385
        %v1722 = vpack.c.b16 %v1390, %v1386
        %v1723 = vpack.c.b16 %v1391, %v1387
        %v1724 = vpack.c.b16 %v1392, %v1388
        %v1725 = vpack.c.b16 %v1397, %v1393
        %v1726 = vpack.c.b16 %v1398, %v1394
        %v1727 = vpack.c.b16 %v1399, %v1395
        %v1728 = vpack.c.b16 %v1400, %v1396
        %v1729 = vpack.c.b16 %v1405, %v1401
        %v1730 = vpack.c.b16 %v1406, %v1402
        %v1731 = vpack.c.b16 %v1407, %v1403
        %v1732 = vpack.c.b16 %v1408, %v1404
        %v1733 = vpack.c.b16 %v1413, %v1409
        %v1734 = vpack.c.b16 %v1414, %v1410
        %v1735 = vpack.c.b16 %v1415, %v1411
        %v1736 = vpack.c.b16 %v1416, %v1412
        %v2057 = vmax.bf16 %v1417, %v1421
        %v2058 = vmax.bf16 %v2057, %v1425
        %v2059 = vmax.bf16 %v2058, %v1429
        %v2060 = vunpack.i.l.bf16 %v2059
        %v2061 = vunpack.i.h.bf16 %v2059
        %v2062 = vmax.f32 %v2060, %v2061
        %v2063 = vrot.slane %v2062, 4
        %v2064 = vmax.f32 %v2062, %v2063
        %v2065 = vrot.slane %v2064, 2
        %v2066 = vmax.f32 %v2064, %v2065
        %v2067 = vrot.slane %v2066, 1
        %v2068 = vmax.f32 %v2066, %v2067
        %v2069 = vpack.i.bf16 %v2068, %v2068
        %v2070 = vmax.bf16 %v1418, %v1422
        %v2071 = vmax.bf16 %v2070, %v1426
        %v2072 = vmax.bf16 %v2071, %v1430
        %v2073 = vunpack.i.l.bf16 %v2072
        %v2074 = vunpack.i.h.bf16 %v2072
        %v2075 = vmax.f32 %v2073, %v2074
        %v2076 = vrot.slane %v2075, 4
        %v2077 = vmax.f32 %v2075, %v2076
        %v2078 = vrot.slane %v2077, 2
        %v2079 = vmax.f32 %v2077, %v2078
        %v2080 = vrot.slane %v2079, 1
        %v2081 = vmax.f32 %v2079, %v2080
        %v2082 = vpack.i.bf16 %v2081, %v2081
        %v2083 = vmax.bf16 %v1419, %v1423
        %v2084 = vmax.bf16 %v2083, %v1427
        %v2085 = vmax.bf16 %v2084, %v1431
        %v2086 = vunpack.i.l.bf16 %v2085
        %v2087 = vunpack.i.h.bf16 %v2085
        %v2088 = vmax.f32 %v2086, %v2087
        %v2089 = vrot.slane %v2088, 4
        %v2090 = vmax.f32 %v2088, %v2089
        %v2091 = vrot.slane %v2090, 2
        %v2092 = vmax.f32 %v2090, %v2091
        %v2093 = vrot.slane %v2092, 1
        %v2094 = vmax.f32 %v2092, %v2093
        %v2095 = vpack.i.bf16 %v2094, %v2094
        %v2096 = vmax.bf16 %v1420, %v1424
        %v2097 = vmax.bf16 %v2096, %v1428
        %v2098 = vmax.bf16 %v2097, %v1432
        %v2099 = vunpack.i.l.bf16 %v2098
        %v2100 = vunpack.i.h.bf16 %v2098
        %v2101 = vmax.f32 %v2099, %v2100
        %v2102 = vrot.slane %v2101, 4
        %v2103 = vmax.f32 %v2101, %v2102
        %v2104 = vrot.slane %v2103, 2
        %v2105 = vmax.f32 %v2103, %v2104
        %v2106 = vrot.slane %v2105, 1
        %v2107 = vmax.f32 %v2105, %v2106
        %v2108 = vpack.i.bf16 %v2107, %v2107
        %v2109 = vmax.bf16 %v1433, %v1437
        %v2110 = vmax.bf16 %v2109, %v1441
        %v2111 = vmax.bf16 %v2110, %v1445
        %v2112 = vunpack.i.l.bf16 %v2111
        %v2113 = vunpack.i.h.bf16 %v2111
        %v2114 = vmax.f32 %v2112, %v2113
        %v2115 = vrot.slane %v2114, 4
        %v2116 = vmax.f32 %v2114, %v2115
        %v2117 = vrot.slane %v2116, 2
        %v2118 = vmax.f32 %v2116, %v2117
        %v2119 = vrot.slane %v2118, 1
        %v2120 = vmax.f32 %v2118, %v2119
        %v2121 = vpack.i.bf16 %v2120, %v2120
        %v2122 = vmax.bf16 %v1434, %v1438
        %v2123 = vmax.bf16 %v2122, %v1442
        %v2124 = vmax.bf16 %v2123, %v1446
        %v2125 = vunpack.i.l.bf16 %v2124
        %v2126 = vunpack.i.h.bf16 %v2124
        %v2127 = vmax.f32 %v2125, %v2126
        %v2128 = vrot.slane %v2127, 4
        %v2129 = vmax.f32 %v2127, %v2128
        %v2130 = vrot.slane %v2129, 2
        %v2131 = vmax.f32 %v2129, %v2130
        %v2132 = vrot.slane %v2131, 1
        %v2133 = vmax.f32 %v2131, %v2132
        %v2134 = vpack.i.bf16 %v2133, %v2133
        %v2135 = vmax.bf16 %v1435, %v1439
        %v2136 = vmax.bf16 %v2135, %v1443
        %v2137 = vmax.bf16 %v2136, %v1447
        %v2138 = vunpack.i.l.bf16 %v2137
        %v2139 = vunpack.i.h.bf16 %v2137
        %v2140 = vmax.f32 %v2138, %v2139
        %v2141 = vrot.slane %v2140, 4
        %v2142 = vmax.f32 %v2140, %v2141
        %v2143 = vrot.slane %v2142, 2
        %v2144 = vmax.f32 %v2142, %v2143
        %v2145 = vrot.slane %v2144, 1
        %v2146 = vmax.f32 %v2144, %v2145
        %v2147 = vpack.i.bf16 %v2146, %v2146
        %v2148 = vmax.bf16 %v1436, %v1440
        %v2149 = vmax.bf16 %v2148, %v1444
        %v2150 = vmax.bf16 %v2149, %v1448
        %v2151 = vunpack.i.l.bf16 %v2150
        %v2152 = vunpack.i.h.bf16 %v2150
        %v2153 = vmax.f32 %v2151, %v2152
        %v2154 = vrot.slane %v2153, 4
        %v2155 = vmax.f32 %v2153, %v2154
        %v2156 = vrot.slane %v2155, 2
        %v2157 = vmax.f32 %v2155, %v2156
        %v2158 = vrot.slane %v2157, 1
        %v2159 = vmax.f32 %v2157, %v2158
        %v2160 = vpack.i.bf16 %v2159, %v2159
        %v2161 = vmax.bf16 %v1449, %v1453
        %v2162 = vmax.bf16 %v2161, %v1457
        %v2163 = vmax.bf16 %v2162, %v1461
        %v2164 = vunpack.i.l.bf16 %v2163
        %v2165 = vunpack.i.h.bf16 %v2163
        %v2166 = vmax.f32 %v2164, %v2165
        %v2167 = vrot.slane %v2166, 4
        %v2168 = vmax.f32 %v2166, %v2167
        %v2169 = vrot.slane %v2168, 2
        %v2170 = vmax.f32 %v2168, %v2169
        %v2171 = vrot.slane %v2170, 1
        %v2172 = vmax.f32 %v2170, %v2171
        %v2173 = vpack.i.bf16 %v2172, %v2172
        %v2174 = vmax.bf16 %v1450, %v1454
        %v2175 = vmax.bf16 %v2174, %v1458
        %v2176 = vmax.bf16 %v2175, %v1462
        %v2177 = vunpack.i.l.bf16 %v2176
        %v2178 = vunpack.i.h.bf16 %v2176
        %v2179 = vmax.f32 %v2177, %v2178
        %v2180 = vrot.slane %v2179, 4
        %v2181 = vmax.f32 %v2179, %v2180
        %v2182 = vrot.slane %v2181, 2
        %v2183 = vmax.f32 %v2181, %v2182
        %v2184 = vrot.slane %v2183, 1
        %v2185 = vmax.f32 %v2183, %v2184
        %v2186 = vpack.i.bf16 %v2185, %v2185
        %v2187 = vmax.bf16 %v1451, %v1455
        %v2188 = vmax.bf16 %v2187, %v1459
        %v2189 = vmax.bf16 %v2188, %v1463
        %v2190 = vunpack.i.l.bf16 %v2189
        %v2191 = vunpack.i.h.bf16 %v2189
        %v2192 = vmax.f32 %v2190, %v2191
        %v2193 = vrot.slane %v2192, 4
        %v2194 = vmax.f32 %v2192, %v2193
        %v2195 = vrot.slane %v2194, 2
        %v2196 = vmax.f32 %v2194, %v2195
        %v2197 = vrot.slane %v2196, 1
        %v2198 = vmax.f32 %v2196, %v2197
        %v2199 = vpack.i.bf16 %v2198, %v2198
        %v2200 = vmax.bf16 %v1452, %v1456
        %v2201 = vmax.bf16 %v2200, %v1460
        %v2202 = vmax.bf16 %v2201, %v1464
        %v2203 = vunpack.i.l.bf16 %v2202
        %v2204 = vunpack.i.h.bf16 %v2202
        %v2205 = vmax.f32 %v2203, %v2204
        %v2206 = vrot.slane %v2205, 4
        %v2207 = vmax.f32 %v2205, %v2206
        %v2208 = vrot.slane %v2207, 2
        %v2209 = vmax.f32 %v2207, %v2208
        %v2210 = vrot.slane %v2209, 1
        %v2211 = vmax.f32 %v2209, %v2210
        %v2212 = vpack.i.bf16 %v2211, %v2211
        %v2213 = vmax.bf16 %v1465, %v1469
        %v2214 = vmax.bf16 %v2213, %v1473
        %v2215 = vmax.bf16 %v2214, %v1477
        %v2216 = vunpack.i.l.bf16 %v2215
        %v2217 = vunpack.i.h.bf16 %v2215
        %v2218 = vmax.f32 %v2216, %v2217
        %v2219 = vrot.slane %v2218, 4
        %v2220 = vmax.f32 %v2218, %v2219
        %v2221 = vrot.slane %v2220, 2
        %v2222 = vmax.f32 %v2220, %v2221
        %v2223 = vrot.slane %v2222, 1
        %v2224 = vmax.f32 %v2222, %v2223
        %v2225 = vpack.i.bf16 %v2224, %v2224
        %v2226 = vmax.bf16 %v1466, %v1470
        %v2227 = vmax.bf16 %v2226, %v1474
        %v2228 = vmax.bf16 %v2227, %v1478
        %v2229 = vunpack.i.l.bf16 %v2228
        %v2230 = vunpack.i.h.bf16 %v2228
        %v2231 = vmax.f32 %v2229, %v2230
        %v2232 = vrot.slane %v2231, 4
        %v2233 = vmax.f32 %v2231, %v2232
        %v2234 = vrot.slane %v2233, 2
        %v2235 = vmax.f32 %v2233, %v2234
        %v2236 = vrot.slane %v2235, 1
        %v2237 = vmax.f32 %v2235, %v2236
        %v2238 = vpack.i.bf16 %v2237, %v2237
        %v2239 = vmax.bf16 %v1467, %v1471
        %v2240 = vmax.bf16 %v2239, %v1475
        %v2241 = vmax.bf16 %v2240, %v1479
        %v2242 = vunpack.i.l.bf16 %v2241
        %v2243 = vunpack.i.h.bf16 %v2241
        %v2244 = vmax.f32 %v2242, %v2243
        %v2245 = vrot.slane %v2244, 4
        %v2246 = vmax.f32 %v2244, %v2245
        %v2247 = vrot.slane %v2246, 2
        %v2248 = vmax.f32 %v2246, %v2247
        %v2249 = vrot.slane %v2248, 1
        %v2250 = vmax.f32 %v2248, %v2249
        %v2251 = vpack.i.bf16 %v2250, %v2250
        %v2252 = vmax.bf16 %v1468, %v1472
        %v2253 = vmax.bf16 %v2252, %v1476
        %v2254 = vmax.bf16 %v2253, %v1480
        %v2255 = vunpack.i.l.bf16 %v2254
        %v2256 = vunpack.i.h.bf16 %v2254
        %v2257 = vmax.f32 %v2255, %v2256
        %v2258 = vrot.slane %v2257, 4
        %v2259 = vmax.f32 %v2257, %v2258
        %v2260 = vrot.slane %v2259, 2
        %v2261 = vmax.f32 %v2259, %v2260
        %v2262 = vrot.slane %v2261, 1
        %v2263 = vmax.f32 %v2261, %v2262
        %v2264 = vpack.i.bf16 %v2263, %v2263
        %v2265 = vmax.bf16 %v1481, %v1485
        %v2266 = vmax.bf16 %v2265, %v1489
        %v2267 = vmax.bf16 %v2266, %v1493
        %v2268 = vunpack.i.l.bf16 %v2267
        %v2269 = vunpack.i.h.bf16 %v2267
        %v2270 = vmax.f32 %v2268, %v2269
        %v2271 = vrot.slane %v2270, 4
        %v2272 = vmax.f32 %v2270, %v2271
        %v2273 = vrot.slane %v2272, 2
        %v2274 = vmax.f32 %v2272, %v2273
        %v2275 = vrot.slane %v2274, 1
        %v2276 = vmax.f32 %v2274, %v2275
        %v2277 = vpack.i.bf16 %v2276, %v2276
        %v2278 = vmax.bf16 %v1482, %v1486
        %v2279 = vmax.bf16 %v2278, %v1490
        %v2280 = vmax.bf16 %v2279, %v1494
        %v2281 = vunpack.i.l.bf16 %v2280
        %v2282 = vunpack.i.h.bf16 %v2280
        %v2283 = vmax.f32 %v2281, %v2282
        %v2284 = vrot.slane %v2283, 4
        %v2285 = vmax.f32 %v2283, %v2284
        %v2286 = vrot.slane %v2285, 2
        %v2287 = vmax.f32 %v2285, %v2286
        %v2288 = vrot.slane %v2287, 1
        %v2289 = vmax.f32 %v2287, %v2288
        %v2290 = vpack.i.bf16 %v2289, %v2289
        %v2291 = vmax.bf16 %v1483, %v1487
        %v2292 = vmax.bf16 %v2291, %v1491
        %v2293 = vmax.bf16 %v2292, %v1495
        %v2294 = vunpack.i.l.bf16 %v2293
        %v2295 = vunpack.i.h.bf16 %v2293
        %v2296 = vmax.f32 %v2294, %v2295
        %v2297 = vrot.slane %v2296, 4
        %v2298 = vmax.f32 %v2296, %v2297
        %v2299 = vrot.slane %v2298, 2
        %v2300 = vmax.f32 %v2298, %v2299
        %v2301 = vrot.slane %v2300, 1
        %v2302 = vmax.f32 %v2300, %v2301
        %v2303 = vpack.i.bf16 %v2302, %v2302
        %v2304 = vmax.bf16 %v1484, %v1488
        %v2305 = vmax.bf16 %v2304, %v1492
        %v2306 = vmax.bf16 %v2305, %v1496
        %v2307 = vunpack.i.l.bf16 %v2306
        %v2308 = vunpack.i.h.bf16 %v2306
        %v2309 = vmax.f32 %v2307, %v2308
        %v2310 = vrot.slane %v2309, 4
        %v2311 = vmax.f32 %v2309, %v2310
        %v2312 = vrot.slane %v2311, 2
        %v2313 = vmax.f32 %v2311, %v2312
        %v2314 = vrot.slane %v2313, 1
        %v2315 = vmax.f32 %v2313, %v2314
        %v2316 = vpack.i.bf16 %v2315, %v2315
        %v2317 = vmax.bf16 %v1497, %v1501
        %v2318 = vmax.bf16 %v2317, %v1505
        %v2319 = vmax.bf16 %v2318, %v1509
        %v2320 = vunpack.i.l.bf16 %v2319
        %v2321 = vunpack.i.h.bf16 %v2319
        %v2322 = vmax.f32 %v2320, %v2321
        %v2323 = vrot.slane %v2322, 4
        %v2324 = vmax.f32 %v2322, %v2323
        %v2325 = vrot.slane %v2324, 2
        %v2326 = vmax.f32 %v2324, %v2325
        %v2327 = vrot.slane %v2326, 1
        %v2328 = vmax.f32 %v2326, %v2327
        %v2329 = vpack.i.bf16 %v2328, %v2328
        %v2330 = vmax.bf16 %v1498, %v1502
        %v2331 = vmax.bf16 %v2330, %v1506
        %v2332 = vmax.bf16 %v2331, %v1510
        %v2333 = vunpack.i.l.bf16 %v2332
        %v2334 = vunpack.i.h.bf16 %v2332
        %v2335 = vmax.f32 %v2333, %v2334
        %v2336 = vrot.slane %v2335, 4
        %v2337 = vmax.f32 %v2335, %v2336
        %v2338 = vrot.slane %v2337, 2
        %v2339 = vmax.f32 %v2337, %v2338
        %v2340 = vrot.slane %v2339, 1
        %v2341 = vmax.f32 %v2339, %v2340
        %v2342 = vpack.i.bf16 %v2341, %v2341
        %v2343 = vmax.bf16 %v1499, %v1503
        %v2344 = vmax.bf16 %v2343, %v1507
        %v2345 = vmax.bf16 %v2344, %v1511
        %v2346 = vunpack.i.l.bf16 %v2345
        %v2347 = vunpack.i.h.bf16 %v2345
        %v2348 = vmax.f32 %v2346, %v2347
        %v2349 = vrot.slane %v2348, 4
        %v2350 = vmax.f32 %v2348, %v2349
        %v2351 = vrot.slane %v2350, 2
        %v2352 = vmax.f32 %v2350, %v2351
        %v2353 = vrot.slane %v2352, 1
        %v2354 = vmax.f32 %v2352, %v2353
        %v2355 = vpack.i.bf16 %v2354, %v2354
        %v2356 = vmax.bf16 %v1500, %v1504
        %v2357 = vmax.bf16 %v2356, %v1508
        %v2358 = vmax.bf16 %v2357, %v1512
        %v2359 = vunpack.i.l.bf16 %v2358
        %v2360 = vunpack.i.h.bf16 %v2358
        %v2361 = vmax.f32 %v2359, %v2360
        %v2362 = vrot.slane %v2361, 4
        %v2363 = vmax.f32 %v2361, %v2362
        %v2364 = vrot.slane %v2363, 2
        %v2365 = vmax.f32 %v2363, %v2364
        %v2366 = vrot.slane %v2365, 1
        %v2367 = vmax.f32 %v2365, %v2366
        %v2368 = vpack.i.bf16 %v2367, %v2367
        %v2369 = vmax.bf16 %v1513, %v1517
        %v2370 = vmax.bf16 %v2369, %v1521
        %v2371 = vmax.bf16 %v2370, %v1525
        %v2372 = vunpack.i.l.bf16 %v2371
        %v2373 = vunpack.i.h.bf16 %v2371
        %v2374 = vmax.f32 %v2372, %v2373
        %v2375 = vrot.slane %v2374, 4
        %v2376 = vmax.f32 %v2374, %v2375
        %v2377 = vrot.slane %v2376, 2
        %v2378 = vmax.f32 %v2376, %v2377
        %v2379 = vrot.slane %v2378, 1
        %v2380 = vmax.f32 %v2378, %v2379
        %v2381 = vpack.i.bf16 %v2380, %v2380
        %v2382 = vmax.bf16 %v1514, %v1518
        %v2383 = vmax.bf16 %v2382, %v1522
        %v2384 = vmax.bf16 %v2383, %v1526
        %v2385 = vunpack.i.l.bf16 %v2384
        %v2386 = vunpack.i.h.bf16 %v2384
        %v2387 = vmax.f32 %v2385, %v2386
        %v2388 = vrot.slane %v2387, 4
        %v2389 = vmax.f32 %v2387, %v2388
        %v2390 = vrot.slane %v2389, 2
        %v2391 = vmax.f32 %v2389, %v2390
        %v2392 = vrot.slane %v2391, 1
        %v2393 = vmax.f32 %v2391, %v2392
        %v2394 = vpack.i.bf16 %v2393, %v2393
        %v2395 = vmax.bf16 %v1515, %v1519
        %v2396 = vmax.bf16 %v2395, %v1523
        %v2397 = vmax.bf16 %v2396, %v1527
        %v2398 = vunpack.i.l.bf16 %v2397
        %v2399 = vunpack.i.h.bf16 %v2397
        %v2400 = vmax.f32 %v2398, %v2399
        %v2401 = vrot.slane %v2400, 4
        %v2402 = vmax.f32 %v2400, %v2401
        %v2403 = vrot.slane %v2402, 2
        %v2404 = vmax.f32 %v2402, %v2403
        %v2405 = vrot.slane %v2404, 1
        %v2406 = vmax.f32 %v2404, %v2405
        %v2407 = vpack.i.bf16 %v2406, %v2406
        %v2408 = vmax.bf16 %v1516, %v1520
        %v2409 = vmax.bf16 %v2408, %v1524
        %v2410 = vmax.bf16 %v2409, %v1528
        %v2411 = vunpack.i.l.bf16 %v2410
        %v2412 = vunpack.i.h.bf16 %v2410
        %v2413 = vmax.f32 %v2411, %v2412
        %v2414 = vrot.slane %v2413, 4
        %v2415 = vmax.f32 %v2413, %v2414
        %v2416 = vrot.slane %v2415, 2
        %v2417 = vmax.f32 %v2415, %v2416
        %v2418 = vrot.slane %v2417, 1
        %v2419 = vmax.f32 %v2417, %v2418
        %v2420 = vpack.i.bf16 %v2419, %v2419
        %v2421 = vmax.bf16 %v1529, %v1533
        %v2422 = vmax.bf16 %v2421, %v1537
        %v2423 = vmax.bf16 %v2422, %v1541
        %v2424 = vunpack.i.l.bf16 %v2423
        %v2425 = vunpack.i.h.bf16 %v2423
        %v2426 = vmax.f32 %v2424, %v2425
        %v2427 = vrot.slane %v2426, 4
        %v2428 = vmax.f32 %v2426, %v2427
        %v2429 = vrot.slane %v2428, 2
        %v2430 = vmax.f32 %v2428, %v2429
        %v2431 = vrot.slane %v2430, 1
        %v2432 = vmax.f32 %v2430, %v2431
        %v2433 = vpack.i.bf16 %v2432, %v2432
        %v2434 = vmax.bf16 %v1530, %v1534
        %v2435 = vmax.bf16 %v2434, %v1538
        %v2436 = vmax.bf16 %v2435, %v1542
        %v2437 = vunpack.i.l.bf16 %v2436
        %v2438 = vunpack.i.h.bf16 %v2436
        %v2439 = vmax.f32 %v2437, %v2438
        %v2440 = vrot.slane %v2439, 4
        %v2441 = vmax.f32 %v2439, %v2440
        %v2442 = vrot.slane %v2441, 2
        %v2443 = vmax.f32 %v2441, %v2442
        %v2444 = vrot.slane %v2443, 1
        %v2445 = vmax.f32 %v2443, %v2444
        %v2446 = vpack.i.bf16 %v2445, %v2445
        %v2447 = vmax.bf16 %v1531, %v1535
        %v2448 = vmax.bf16 %v2447, %v1539
        %v2449 = vmax.bf16 %v2448, %v1543
        %v2450 = vunpack.i.l.bf16 %v2449
        %v2451 = vunpack.i.h.bf16 %v2449
        %v2452 = vmax.f32 %v2450, %v2451
        %v2453 = vrot.slane %v2452, 4
        %v2454 = vmax.f32 %v2452, %v2453
        %v2455 = vrot.slane %v2454, 2
        %v2456 = vmax.f32 %v2454, %v2455
        %v2457 = vrot.slane %v2456, 1
        %v2458 = vmax.f32 %v2456, %v2457
        %v2459 = vpack.i.bf16 %v2458, %v2458
        %v2460 = vmax.bf16 %v1532, %v1536
        %v2461 = vmax.bf16 %v2460, %v1540
        %v2462 = vmax.bf16 %v2461, %v1544
        %v2463 = vunpack.i.l.bf16 %v2462
        %v2464 = vunpack.i.h.bf16 %v2462
        %v2465 = vmax.f32 %v2463, %v2464
        %v2466 = vrot.slane %v2465, 4
        %v2467 = vmax.f32 %v2465, %v2466
        %v2468 = vrot.slane %v2467, 2
        %v2469 = vmax.f32 %v2467, %v2468
        %v2470 = vrot.slane %v2469, 1
        %v2471 = vmax.f32 %v2469, %v2470
        %v2472 = vpack.i.bf16 %v2471, %v2471
        %v2473 = vmax.bf16 %v1545, %v1549
        %v2474 = vmax.bf16 %v2473, %v1553
        %v2475 = vmax.bf16 %v2474, %v1557
        %v2476 = vunpack.i.l.bf16 %v2475
        %v2477 = vunpack.i.h.bf16 %v2475
        %v2478 = vmax.f32 %v2476, %v2477
        %v2479 = vrot.slane %v2478, 4
        %v2480 = vmax.f32 %v2478, %v2479
        %v2481 = vrot.slane %v2480, 2
        %v2482 = vmax.f32 %v2480, %v2481
        %v2483 = vrot.slane %v2482, 1
        %v2484 = vmax.f32 %v2482, %v2483
        %v2485 = vpack.i.bf16 %v2484, %v2484
        %v2486 = vmax.bf16 %v1546, %v1550
        %v2487 = vmax.bf16 %v2486, %v1554
        %v2488 = vmax.bf16 %v2487, %v1558
        %v2489 = vunpack.i.l.bf16 %v2488
        %v2490 = vunpack.i.h.bf16 %v2488
        %v2491 = vmax.f32 %v2489, %v2490
        %v2492 = vrot.slane %v2491, 4
        %v2493 = vmax.f32 %v2491, %v2492
        %v2494 = vrot.slane %v2493, 2
        %v2495 = vmax.f32 %v2493, %v2494
        %v2496 = vrot.slane %v2495, 1
        %v2497 = vmax.f32 %v2495, %v2496
        %v2498 = vpack.i.bf16 %v2497, %v2497
        %v2499 = vmax.bf16 %v1547, %v1551
        %v2500 = vmax.bf16 %v2499, %v1555
        %v2501 = vmax.bf16 %v2500, %v1559
        %v2502 = vunpack.i.l.bf16 %v2501
        %v2503 = vunpack.i.h.bf16 %v2501
        %v2504 = vmax.f32 %v2502, %v2503
        %v2505 = vrot.slane %v2504, 4
        %v2506 = vmax.f32 %v2504, %v2505
        %v2507 = vrot.slane %v2506, 2
        %v2508 = vmax.f32 %v2506, %v2507
        %v2509 = vrot.slane %v2508, 1
        %v2510 = vmax.f32 %v2508, %v2509
        %v2511 = vpack.i.bf16 %v2510, %v2510
        %v2512 = vmax.bf16 %v1548, %v1552
        %v2513 = vmax.bf16 %v2512, %v1556
        %v2514 = vmax.bf16 %v2513, %v1560
        %v2515 = vunpack.i.l.bf16 %v2514
        %v2516 = vunpack.i.h.bf16 %v2514
        %v2517 = vmax.f32 %v2515, %v2516
        %v2518 = vrot.slane %v2517, 4
        %v2519 = vmax.f32 %v2517, %v2518
        %v2520 = vrot.slane %v2519, 2
        %v2521 = vmax.f32 %v2519, %v2520
        %v2522 = vrot.slane %v2521, 1
        %v2523 = vmax.f32 %v2521, %v2522
        %v2524 = vpack.i.bf16 %v2523, %v2523
        %v2525 = vmax.bf16 %v1561, %v1565
        %v2526 = vmax.bf16 %v2525, %v1569
        %v2527 = vmax.bf16 %v2526, %v1573
        %v2528 = vunpack.i.l.bf16 %v2527
        %v2529 = vunpack.i.h.bf16 %v2527
        %v2530 = vmax.f32 %v2528, %v2529
        %v2531 = vrot.slane %v2530, 4
        %v2532 = vmax.f32 %v2530, %v2531
        %v2533 = vrot.slane %v2532, 2
        %v2534 = vmax.f32 %v2532, %v2533
        %v2535 = vrot.slane %v2534, 1
        %v2536 = vmax.f32 %v2534, %v2535
        %v2537 = vpack.i.bf16 %v2536, %v2536
        %v2538 = vmax.bf16 %v1562, %v1566
        %v2539 = vmax.bf16 %v2538, %v1570
        %v2540 = vmax.bf16 %v2539, %v1574
        %v2541 = vunpack.i.l.bf16 %v2540
        %v2542 = vunpack.i.h.bf16 %v2540
        %v2543 = vmax.f32 %v2541, %v2542
        %v2544 = vrot.slane %v2543, 4
        %v2545 = vmax.f32 %v2543, %v2544
        %v2546 = vrot.slane %v2545, 2
        %v2547 = vmax.f32 %v2545, %v2546
        %v2548 = vrot.slane %v2547, 1
        %v2549 = vmax.f32 %v2547, %v2548
        %v2550 = vpack.i.bf16 %v2549, %v2549
        %v2551 = vmax.bf16 %v1563, %v1567
        %v2552 = vmax.bf16 %v2551, %v1571
        %v2553 = vmax.bf16 %v2552, %v1575
        %v2554 = vunpack.i.l.bf16 %v2553
        %v2555 = vunpack.i.h.bf16 %v2553
        %v2556 = vmax.f32 %v2554, %v2555
        %v2557 = vrot.slane %v2556, 4
        %v2558 = vmax.f32 %v2556, %v2557
        %v2559 = vrot.slane %v2558, 2
        %v2560 = vmax.f32 %v2558, %v2559
        %v2561 = vrot.slane %v2560, 1
        %v2562 = vmax.f32 %v2560, %v2561
        %v2563 = vpack.i.bf16 %v2562, %v2562
        %v2564 = vmax.bf16 %v1564, %v1568
        %v2565 = vmax.bf16 %v2564, %v1572
        %v2566 = vmax.bf16 %v2565, %v1576
        %v2567 = vunpack.i.l.bf16 %v2566
        %v2568 = vunpack.i.h.bf16 %v2566
        %v2569 = vmax.f32 %v2567, %v2568
        %v2570 = vrot.slane %v2569, 4
        %v2571 = vmax.f32 %v2569, %v2570
        %v2572 = vrot.slane %v2571, 2
        %v2573 = vmax.f32 %v2571, %v2572
        %v2574 = vrot.slane %v2573, 1
        %v2575 = vmax.f32 %v2573, %v2574
        %v2576 = vpack.i.bf16 %v2575, %v2575
        %v2577 = vmax.bf16 %v1577, %v1581
        %v2578 = vmax.bf16 %v2577, %v1585
        %v2579 = vmax.bf16 %v2578, %v1589
        %v2580 = vunpack.i.l.bf16 %v2579
        %v2581 = vunpack.i.h.bf16 %v2579
        %v2582 = vmax.f32 %v2580, %v2581
        %v2583 = vrot.slane %v2582, 4
        %v2584 = vmax.f32 %v2582, %v2583
        %v2585 = vrot.slane %v2584, 2
        %v2586 = vmax.f32 %v2584, %v2585
        %v2587 = vrot.slane %v2586, 1
        %v2588 = vmax.f32 %v2586, %v2587
        %v2589 = vpack.i.bf16 %v2588, %v2588
        %v2590 = vmax.bf16 %v1578, %v1582
        %v2591 = vmax.bf16 %v2590, %v1586
        %v2592 = vmax.bf16 %v2591, %v1590
        %v2593 = vunpack.i.l.bf16 %v2592
        %v2594 = vunpack.i.h.bf16 %v2592
        %v2595 = vmax.f32 %v2593, %v2594
        %v2596 = vrot.slane %v2595, 4
        %v2597 = vmax.f32 %v2595, %v2596
        %v2598 = vrot.slane %v2597, 2
        %v2599 = vmax.f32 %v2597, %v2598
        %v2600 = vrot.slane %v2599, 1
        %v2601 = vmax.f32 %v2599, %v2600
        %v2602 = vpack.i.bf16 %v2601, %v2601
        %v2603 = vmax.bf16 %v1579, %v1583
        %v2604 = vmax.bf16 %v2603, %v1587
        %v2605 = vmax.bf16 %v2604, %v1591
        %v2606 = vunpack.i.l.bf16 %v2605
        %v2607 = vunpack.i.h.bf16 %v2605
        %v2608 = vmax.f32 %v2606, %v2607
        %v2609 = vrot.slane %v2608, 4
        %v2610 = vmax.f32 %v2608, %v2609
        %v2611 = vrot.slane %v2610, 2
        %v2612 = vmax.f32 %v2610, %v2611
        %v2613 = vrot.slane %v2612, 1
        %v2614 = vmax.f32 %v2612, %v2613
        %v2615 = vpack.i.bf16 %v2614, %v2614
        %v2616 = vmax.bf16 %v1580, %v1584
        %v2617 = vmax.bf16 %v2616, %v1588
        %v2618 = vmax.bf16 %v2617, %v1592
        %v2619 = vunpack.i.l.bf16 %v2618
        %v2620 = vunpack.i.h.bf16 %v2618
        %v2621 = vmax.f32 %v2619, %v2620
        %v2622 = vrot.slane %v2621, 4
        %v2623 = vmax.f32 %v2621, %v2622
        %v2624 = vrot.slane %v2623, 2
        %v2625 = vmax.f32 %v2623, %v2624
        %v2626 = vrot.slane %v2625, 1
        %v2627 = vmax.f32 %v2625, %v2626
        %v2628 = vpack.i.bf16 %v2627, %v2627
        %v2629 = vmax.bf16 %v1593, %v1597
        %v2630 = vmax.bf16 %v2629, %v1601
        %v2631 = vmax.bf16 %v2630, %v1605
        %v2632 = vunpack.i.l.bf16 %v2631
        %v2633 = vunpack.i.h.bf16 %v2631
        %v2634 = vmax.f32 %v2632, %v2633
        %v2635 = vrot.slane %v2634, 4
        %v2636 = vmax.f32 %v2634, %v2635
        %v2637 = vrot.slane %v2636, 2
        %v2638 = vmax.f32 %v2636, %v2637
        %v2639 = vrot.slane %v2638, 1
        %v2640 = vmax.f32 %v2638, %v2639
        %v2641 = vpack.i.bf16 %v2640, %v2640
        %v2642 = vmax.bf16 %v1594, %v1598
        %v2643 = vmax.bf16 %v2642, %v1602
        %v2644 = vmax.bf16 %v2643, %v1606
        %v2645 = vunpack.i.l.bf16 %v2644
        %v2646 = vunpack.i.h.bf16 %v2644
        %v2647 = vmax.f32 %v2645, %v2646
        %v2648 = vrot.slane %v2647, 4
        %v2649 = vmax.f32 %v2647, %v2648
        %v2650 = vrot.slane %v2649, 2
        %v2651 = vmax.f32 %v2649, %v2650
        %v2652 = vrot.slane %v2651, 1
        %v2653 = vmax.f32 %v2651, %v2652
        %v2654 = vpack.i.bf16 %v2653, %v2653
        %v2655 = vmax.bf16 %v1595, %v1599
        %v2656 = vmax.bf16 %v2655, %v1603
        %v2657 = vmax.bf16 %v2656, %v1607
        %v2658 = vunpack.i.l.bf16 %v2657
        %v2659 = vunpack.i.h.bf16 %v2657
        %v2660 = vmax.f32 %v2658, %v2659
        %v2661 = vrot.slane %v2660, 4
        %v2662 = vmax.f32 %v2660, %v2661
        %v2663 = vrot.slane %v2662, 2
        %v2664 = vmax.f32 %v2662, %v2663
        %v2665 = vrot.slane %v2664, 1
        %v2666 = vmax.f32 %v2664, %v2665
        %v2667 = vpack.i.bf16 %v2666, %v2666
        %v2668 = vmax.bf16 %v1596, %v1600
        %v2669 = vmax.bf16 %v2668, %v1604
        %v2670 = vmax.bf16 %v2669, %v1608
        %v2671 = vunpack.i.l.bf16 %v2670
        %v2672 = vunpack.i.h.bf16 %v2670
        %v2673 = vmax.f32 %v2671, %v2672
        %v2674 = vrot.slane %v2673, 4
        %v2675 = vmax.f32 %v2673, %v2674
        %v2676 = vrot.slane %v2675, 2
        %v2677 = vmax.f32 %v2675, %v2676
        %v2678 = vrot.slane %v2677, 1
        %v2679 = vmax.f32 %v2677, %v2678
        %v2680 = vpack.i.bf16 %v2679, %v2679
        %v2681 = vmax.bf16 %v1609, %v1613
        %v2682 = vmax.bf16 %v2681, %v1617
        %v2683 = vmax.bf16 %v2682, %v1621
        %v2684 = vunpack.i.l.bf16 %v2683
        %v2685 = vunpack.i.h.bf16 %v2683
        %v2686 = vmax.f32 %v2684, %v2685
        %v2687 = vrot.slane %v2686, 4
        %v2688 = vmax.f32 %v2686, %v2687
        %v2689 = vrot.slane %v2688, 2
        %v2690 = vmax.f32 %v2688, %v2689
        %v2691 = vrot.slane %v2690, 1
        %v2692 = vmax.f32 %v2690, %v2691
        %v2693 = vpack.i.bf16 %v2692, %v2692
        %v2694 = vmax.bf16 %v1610, %v1614
        %v2695 = vmax.bf16 %v2694, %v1618
        %v2696 = vmax.bf16 %v2695, %v1622
        %v2697 = vunpack.i.l.bf16 %v2696
        %v2698 = vunpack.i.h.bf16 %v2696
        %v2699 = vmax.f32 %v2697, %v2698
        %v2700 = vrot.slane %v2699, 4
        %v2701 = vmax.f32 %v2699, %v2700
        %v2702 = vrot.slane %v2701, 2
        %v2703 = vmax.f32 %v2701, %v2702
        %v2704 = vrot.slane %v2703, 1
        %v2705 = vmax.f32 %v2703, %v2704
        %v2706 = vpack.i.bf16 %v2705, %v2705
        %v2707 = vmax.bf16 %v1611, %v1615
        %v2708 = vmax.bf16 %v2707, %v1619
        %v2709 = vmax.bf16 %v2708, %v1623
        %v2710 = vunpack.i.l.bf16 %v2709
        %v2711 = vunpack.i.h.bf16 %v2709
        %v2712 = vmax.f32 %v2710, %v2711
        %v2713 = vrot.slane %v2712, 4
        %v2714 = vmax.f32 %v2712, %v2713
        %v2715 = vrot.slane %v2714, 2
        %v2716 = vmax.f32 %v2714, %v2715
        %v2717 = vrot.slane %v2716, 1
        %v2718 = vmax.f32 %v2716, %v2717
        %v2719 = vpack.i.bf16 %v2718, %v2718
        %v2720 = vmax.bf16 %v1612, %v1616
        %v2721 = vmax.bf16 %v2720, %v1620
        %v2722 = vmax.bf16 %v2721, %v1624
        %v2723 = vunpack.i.l.bf16 %v2722
        %v2724 = vunpack.i.h.bf16 %v2722
        %v2725 = vmax.f32 %v2723, %v2724
        %v2726 = vrot.slane %v2725, 4
        %v2727 = vmax.f32 %v2725, %v2726
        %v2728 = vrot.slane %v2727, 2
        %v2729 = vmax.f32 %v2727, %v2728
        %v2730 = vrot.slane %v2729, 1
        %v2731 = vmax.f32 %v2729, %v2730
        %v2732 = vpack.i.bf16 %v2731, %v2731
        %v2733 = vmax.bf16 %v1625, %v1629
        %v2734 = vmax.bf16 %v2733, %v1633
        %v2735 = vmax.bf16 %v2734, %v1637
        %v2736 = vunpack.i.l.bf16 %v2735
        %v2737 = vunpack.i.h.bf16 %v2735
        %v2738 = vmax.f32 %v2736, %v2737
        %v2739 = vrot.slane %v2738, 4
        %v2740 = vmax.f32 %v2738, %v2739
        %v2741 = vrot.slane %v2740, 2
        %v2742 = vmax.f32 %v2740, %v2741
        %v2743 = vrot.slane %v2742, 1
        %v2744 = vmax.f32 %v2742, %v2743
        %v2745 = vpack.i.bf16 %v2744, %v2744
        %v2746 = vmax.bf16 %v1626, %v1630
        %v2747 = vmax.bf16 %v2746, %v1634
        %v2748 = vmax.bf16 %v2747, %v1638
        %v2749 = vunpack.i.l.bf16 %v2748
        %v2750 = vunpack.i.h.bf16 %v2748
        %v2751 = vmax.f32 %v2749, %v2750
        %v2752 = vrot.slane %v2751, 4
        %v2753 = vmax.f32 %v2751, %v2752
        %v2754 = vrot.slane %v2753, 2
        %v2755 = vmax.f32 %v2753, %v2754
        %v2756 = vrot.slane %v2755, 1
        %v2757 = vmax.f32 %v2755, %v2756
        %v2758 = vpack.i.bf16 %v2757, %v2757
        %v2759 = vmax.bf16 %v1627, %v1631
        %v2760 = vmax.bf16 %v2759, %v1635
        %v2761 = vmax.bf16 %v2760, %v1639
        %v2762 = vunpack.i.l.bf16 %v2761
        %v2763 = vunpack.i.h.bf16 %v2761
        %v2764 = vmax.f32 %v2762, %v2763
        %v2765 = vrot.slane %v2764, 4
        %v2766 = vmax.f32 %v2764, %v2765
        %v2767 = vrot.slane %v2766, 2
        %v2768 = vmax.f32 %v2766, %v2767
        %v2769 = vrot.slane %v2768, 1
        %v2770 = vmax.f32 %v2768, %v2769
        %v2771 = vpack.i.bf16 %v2770, %v2770
        %v2772 = vmax.bf16 %v1628, %v1632
        %v2773 = vmax.bf16 %v2772, %v1636
        %v2774 = vmax.bf16 %v2773, %v1640
        %v2775 = vunpack.i.l.bf16 %v2774
        %v2776 = vunpack.i.h.bf16 %v2774
        %v2777 = vmax.f32 %v2775, %v2776
        %v2778 = vrot.slane %v2777, 4
        %v2779 = vmax.f32 %v2777, %v2778
        %v2780 = vrot.slane %v2779, 2
        %v2781 = vmax.f32 %v2779, %v2780
        %v2782 = vrot.slane %v2781, 1
        %v2783 = vmax.f32 %v2781, %v2782
        %v2784 = vpack.i.bf16 %v2783, %v2783
        %v2785 = vmax.bf16 %v1641, %v1645
        %v2786 = vmax.bf16 %v2785, %v1649
        %v2787 = vmax.bf16 %v2786, %v1653
        %v2788 = vunpack.i.l.bf16 %v2787
        %v2789 = vunpack.i.h.bf16 %v2787
        %v2790 = vmax.f32 %v2788, %v2789
        %v2791 = vrot.slane %v2790, 4
        %v2792 = vmax.f32 %v2790, %v2791
        %v2793 = vrot.slane %v2792, 2
        %v2794 = vmax.f32 %v2792, %v2793
        %v2795 = vrot.slane %v2794, 1
        %v2796 = vmax.f32 %v2794, %v2795
        %v2797 = vpack.i.bf16 %v2796, %v2796
        %v2798 = vmax.bf16 %v1642, %v1646
        %v2799 = vmax.bf16 %v2798, %v1650
        %v2800 = vmax.bf16 %v2799, %v1654
        %v2801 = vunpack.i.l.bf16 %v2800
        %v2802 = vunpack.i.h.bf16 %v2800
        %v2803 = vmax.f32 %v2801, %v2802
        %v2804 = vrot.slane %v2803, 4
        %v2805 = vmax.f32 %v2803, %v2804
        %v2806 = vrot.slane %v2805, 2
        %v2807 = vmax.f32 %v2805, %v2806
        %v2808 = vrot.slane %v2807, 1
        %v2809 = vmax.f32 %v2807, %v2808
        %v2810 = vpack.i.bf16 %v2809, %v2809
        %v2811 = vmax.bf16 %v1643, %v1647
        %v2812 = vmax.bf16 %v2811, %v1651
        %v2813 = vmax.bf16 %v2812, %v1655
        %v2814 = vunpack.i.l.bf16 %v2813
        %v2815 = vunpack.i.h.bf16 %v2813
        %v2816 = vmax.f32 %v2814, %v2815
        %v2817 = vrot.slane %v2816, 4
        %v2818 = vmax.f32 %v2816, %v2817
        %v2819 = vrot.slane %v2818, 2
        %v2820 = vmax.f32 %v2818, %v2819
        %v2821 = vrot.slane %v2820, 1
        %v2822 = vmax.f32 %v2820, %v2821
        %v2823 = vpack.i.bf16 %v2822, %v2822
        %v2824 = vmax.bf16 %v1644, %v1648
        %v2825 = vmax.bf16 %v2824, %v1652
        %v2826 = vmax.bf16 %v2825, %v1656
        %v2827 = vunpack.i.l.bf16 %v2826
        %v2828 = vunpack.i.h.bf16 %v2826
        %v2829 = vmax.f32 %v2827, %v2828
        %v2830 = vrot.slane %v2829, 4
        %v2831 = vmax.f32 %v2829, %v2830
        %v2832 = vrot.slane %v2831, 2
        %v2833 = vmax.f32 %v2831, %v2832
        %v2834 = vrot.slane %v2833, 1
        %v2835 = vmax.f32 %v2833, %v2834
        %v2836 = vpack.i.bf16 %v2835, %v2835
        %v2837 = vmax.bf16 %v1657, %v1661
        %v2838 = vmax.bf16 %v2837, %v1665
        %v2839 = vmax.bf16 %v2838, %v1669
        %v2840 = vunpack.i.l.bf16 %v2839
        %v2841 = vunpack.i.h.bf16 %v2839
        %v2842 = vmax.f32 %v2840, %v2841
        %v2843 = vrot.slane %v2842, 4
        %v2844 = vmax.f32 %v2842, %v2843
        %v2845 = vrot.slane %v2844, 2
        %v2846 = vmax.f32 %v2844, %v2845
        %v2847 = vrot.slane %v2846, 1
        %v2848 = vmax.f32 %v2846, %v2847
        %v2849 = vpack.i.bf16 %v2848, %v2848
        %v2850 = vmax.bf16 %v1658, %v1662
        %v2851 = vmax.bf16 %v2850, %v1666
        %v2852 = vmax.bf16 %v2851, %v1670
        %v2853 = vunpack.i.l.bf16 %v2852
        %v2854 = vunpack.i.h.bf16 %v2852
        %v2855 = vmax.f32 %v2853, %v2854
        %v2856 = vrot.slane %v2855, 4
        %v2857 = vmax.f32 %v2855, %v2856
        %v2858 = vrot.slane %v2857, 2
        %v2859 = vmax.f32 %v2857, %v2858
        %v2860 = vrot.slane %v2859, 1
        %v2861 = vmax.f32 %v2859, %v2860
        %v2862 = vpack.i.bf16 %v2861, %v2861
        %v2863 = vmax.bf16 %v1659, %v1663
        %v2864 = vmax.bf16 %v2863, %v1667
        %v2865 = vmax.bf16 %v2864, %v1671
        %v2866 = vunpack.i.l.bf16 %v2865
        %v2867 = vunpack.i.h.bf16 %v2865
        %v2868 = vmax.f32 %v2866, %v2867
        %v2869 = vrot.slane %v2868, 4
        %v2870 = vmax.f32 %v2868, %v2869
        %v2871 = vrot.slane %v2870, 2
        %v2872 = vmax.f32 %v2870, %v2871
        %v2873 = vrot.slane %v2872, 1
        %v2874 = vmax.f32 %v2872, %v2873
        %v2875 = vpack.i.bf16 %v2874, %v2874
        %v2876 = vmax.bf16 %v1660, %v1664
        %v2877 = vmax.bf16 %v2876, %v1668
        %v2878 = vmax.bf16 %v2877, %v1672
        %v2879 = vunpack.i.l.bf16 %v2878
        %v2880 = vunpack.i.h.bf16 %v2878
        %v2881 = vmax.f32 %v2879, %v2880
        %v2882 = vrot.slane %v2881, 4
        %v2883 = vmax.f32 %v2881, %v2882
        %v2884 = vrot.slane %v2883, 2
        %v2885 = vmax.f32 %v2883, %v2884
        %v2886 = vrot.slane %v2885, 1
        %v2887 = vmax.f32 %v2885, %v2886
        %v2888 = vpack.i.bf16 %v2887, %v2887
        %v2889 = vmax.bf16 %v1673, %v1677
        %v2890 = vmax.bf16 %v2889, %v1681
        %v2891 = vmax.bf16 %v2890, %v1685
        %v2892 = vunpack.i.l.bf16 %v2891
        %v2893 = vunpack.i.h.bf16 %v2891
        %v2894 = vmax.f32 %v2892, %v2893
        %v2895 = vrot.slane %v2894, 4
        %v2896 = vmax.f32 %v2894, %v2895
        %v2897 = vrot.slane %v2896, 2
        %v2898 = vmax.f32 %v2896, %v2897
        %v2899 = vrot.slane %v2898, 1
        %v2900 = vmax.f32 %v2898, %v2899
        %v2901 = vpack.i.bf16 %v2900, %v2900
        %v2902 = vmax.bf16 %v1674, %v1678
        %v2903 = vmax.bf16 %v2902, %v1682
        %v2904 = vmax.bf16 %v2903, %v1686
        %v2905 = vunpack.i.l.bf16 %v2904
        %v2906 = vunpack.i.h.bf16 %v2904
        %v2907 = vmax.f32 %v2905, %v2906
        %v2908 = vrot.slane %v2907, 4
        %v2909 = vmax.f32 %v2907, %v2908
        %v2910 = vrot.slane %v2909, 2
        %v2911 = vmax.f32 %v2909, %v2910
        %v2912 = vrot.slane %v2911, 1
        %v2913 = vmax.f32 %v2911, %v2912
        %v2914 = vpack.i.bf16 %v2913, %v2913
        %v2915 = vmax.bf16 %v1675, %v1679
        %v2916 = vmax.bf16 %v2915, %v1683
        %v2917 = vmax.bf16 %v2916, %v1687
        %v2918 = vunpack.i.l.bf16 %v2917
        %v2919 = vunpack.i.h.bf16 %v2917
        %v2920 = vmax.f32 %v2918, %v2919
        %v2921 = vrot.slane %v2920, 4
        %v2922 = vmax.f32 %v2920, %v2921
        %v2923 = vrot.slane %v2922, 2
        %v2924 = vmax.f32 %v2922, %v2923
        %v2925 = vrot.slane %v2924, 1
        %v2926 = vmax.f32 %v2924, %v2925
        %v2927 = vpack.i.bf16 %v2926, %v2926
        %v2928 = vmax.bf16 %v1676, %v1680
        %v2929 = vmax.bf16 %v2928, %v1684
        %v2930 = vmax.bf16 %v2929, %v1688
        %v2931 = vunpack.i.l.bf16 %v2930
        %v2932 = vunpack.i.h.bf16 %v2930
        %v2933 = vmax.f32 %v2931, %v2932
        %v2934 = vrot.slane %v2933, 4
        %v2935 = vmax.f32 %v2933, %v2934
        %v2936 = vrot.slane %v2935, 2
        %v2937 = vmax.f32 %v2935, %v2936
        %v2938 = vrot.slane %v2937, 1
        %v2939 = vmax.f32 %v2937, %v2938
        %v2940 = vpack.i.bf16 %v2939, %v2939
        %v2941 = vmax.bf16 %v1689, %v1693
        %v2942 = vmax.bf16 %v2941, %v1697
        %v2943 = vmax.bf16 %v2942, %v1701
        %v2944 = vunpack.i.l.bf16 %v2943
        %v2945 = vunpack.i.h.bf16 %v2943
        %v2946 = vmax.f32 %v2944, %v2945
        %v2947 = vrot.slane %v2946, 4
        %v2948 = vmax.f32 %v2946, %v2947
        %v2949 = vrot.slane %v2948, 2
        %v2950 = vmax.f32 %v2948, %v2949
        %v2951 = vrot.slane %v2950, 1
        %v2952 = vmax.f32 %v2950, %v2951
        %v2953 = vpack.i.bf16 %v2952, %v2952
        %v2954 = vmax.bf16 %v1690, %v1694
        %v2955 = vmax.bf16 %v2954, %v1698
        %v2956 = vmax.bf16 %v2955, %v1702
        %v2957 = vunpack.i.l.bf16 %v2956
        %v2958 = vunpack.i.h.bf16 %v2956
        %v2959 = vmax.f32 %v2957, %v2958
        %v2960 = vrot.slane %v2959, 4
        %v2961 = vmax.f32 %v2959, %v2960
        %v2962 = vrot.slane %v2961, 2
        %v2963 = vmax.f32 %v2961, %v2962
        %v2964 = vrot.slane %v2963, 1
        %v2965 = vmax.f32 %v2963, %v2964
        %v2966 = vpack.i.bf16 %v2965, %v2965
        %v2967 = vmax.bf16 %v1691, %v1695
        %v2968 = vmax.bf16 %v2967, %v1699
        %v2969 = vmax.bf16 %v2968, %v1703
        %v2970 = vunpack.i.l.bf16 %v2969
        %v2971 = vunpack.i.h.bf16 %v2969
        %v2972 = vmax.f32 %v2970, %v2971
        %v2973 = vrot.slane %v2972, 4
        %v2974 = vmax.f32 %v2972, %v2973
        %v2975 = vrot.slane %v2974, 2
        %v2976 = vmax.f32 %v2974, %v2975
        %v2977 = vrot.slane %v2976, 1
        %v2978 = vmax.f32 %v2976, %v2977
        %v2979 = vpack.i.bf16 %v2978, %v2978
        %v2980 = vmax.bf16 %v1692, %v1696
        %v2981 = vmax.bf16 %v2980, %v1700
        %v2982 = vmax.bf16 %v2981, %v1704
        %v2983 = vunpack.i.l.bf16 %v2982
        %v2984 = vunpack.i.h.bf16 %v2982
        %v2985 = vmax.f32 %v2983, %v2984
        %v2986 = vrot.slane %v2985, 4
        %v2987 = vmax.f32 %v2985, %v2986
        %v2988 = vrot.slane %v2987, 2
        %v2989 = vmax.f32 %v2987, %v2988
        %v2990 = vrot.slane %v2989, 1
        %v2991 = vmax.f32 %v2989, %v2990
        %v2992 = vpack.i.bf16 %v2991, %v2991
        %v2993 = vmax.bf16 %v1705, %v1709
        %v2994 = vmax.bf16 %v2993, %v1713
        %v2995 = vmax.bf16 %v2994, %v1717
        %v2996 = vunpack.i.l.bf16 %v2995
        %v2997 = vunpack.i.h.bf16 %v2995
        %v2998 = vmax.f32 %v2996, %v2997
        %v2999 = vrot.slane %v2998, 4
        %v3000 = vmax.f32 %v2998, %v2999
        %v3001 = vrot.slane %v3000, 2
        %v3002 = vmax.f32 %v3000, %v3001
        %v3003 = vrot.slane %v3002, 1
        %v3004 = vmax.f32 %v3002, %v3003
        %v3005 = vpack.i.bf16 %v3004, %v3004
        %v3006 = vmax.bf16 %v1706, %v1710
        %v3007 = vmax.bf16 %v3006, %v1714
        %v3008 = vmax.bf16 %v3007, %v1718
        %v3009 = vunpack.i.l.bf16 %v3008
        %v3010 = vunpack.i.h.bf16 %v3008
        %v3011 = vmax.f32 %v3009, %v3010
        %v3012 = vrot.slane %v3011, 4
        %v3013 = vmax.f32 %v3011, %v3012
        %v3014 = vrot.slane %v3013, 2
        %v3015 = vmax.f32 %v3013, %v3014
        %v3016 = vrot.slane %v3015, 1
        %v3017 = vmax.f32 %v3015, %v3016
        %v3018 = vpack.i.bf16 %v3017, %v3017
        %v3019 = vmax.bf16 %v1707, %v1711
        %v3020 = vmax.bf16 %v3019, %v1715
        %v3021 = vmax.bf16 %v3020, %v1719
        %v3022 = vunpack.i.l.bf16 %v3021
        %v3023 = vunpack.i.h.bf16 %v3021
        %v3024 = vmax.f32 %v3022, %v3023
        %v3025 = vrot.slane %v3024, 4
        %v3026 = vmax.f32 %v3024, %v3025
        %v3027 = vrot.slane %v3026, 2
        %v3028 = vmax.f32 %v3026, %v3027
        %v3029 = vrot.slane %v3028, 1
        %v3030 = vmax.f32 %v3028, %v3029
        %v3031 = vpack.i.bf16 %v3030, %v3030
        %v3032 = vmax.bf16 %v1708, %v1712
        %v3033 = vmax.bf16 %v3032, %v1716
        %v3034 = vmax.bf16 %v3033, %v1720
        %v3035 = vunpack.i.l.bf16 %v3034
        %v3036 = vunpack.i.h.bf16 %v3034
        %v3037 = vmax.f32 %v3035, %v3036
        %v3038 = vrot.slane %v3037, 4
        %v3039 = vmax.f32 %v3037, %v3038
        %v3040 = vrot.slane %v3039, 2
        %v3041 = vmax.f32 %v3039, %v3040
        %v3042 = vrot.slane %v3041, 1
        %v3043 = vmax.f32 %v3041, %v3042
        %v3044 = vpack.i.bf16 %v3043, %v3043
        %v3045 = vmax.bf16 %v1721, %v1725
        %v3046 = vmax.bf16 %v3045, %v1729
        %v3047 = vmax.bf16 %v3046, %v1733
        %v3048 = vunpack.i.l.bf16 %v3047
        %v3049 = vunpack.i.h.bf16 %v3047
        %v3050 = vmax.f32 %v3048, %v3049
        %v3051 = vrot.slane %v3050, 4
        %v3052 = vmax.f32 %v3050, %v3051
        %v3053 = vrot.slane %v3052, 2
        %v3054 = vmax.f32 %v3052, %v3053
        %v3055 = vrot.slane %v3054, 1
        %v3056 = vmax.f32 %v3054, %v3055
        %v3057 = vpack.i.bf16 %v3056, %v3056
        %v3058 = vmax.bf16 %v1722, %v1726
        %v3059 = vmax.bf16 %v3058, %v1730
        %v3060 = vmax.bf16 %v3059, %v1734
        %v3061 = vunpack.i.l.bf16 %v3060
        %v3062 = vunpack.i.h.bf16 %v3060
        %v3063 = vmax.f32 %v3061, %v3062
        %v3064 = vrot.slane %v3063, 4
        %v3065 = vmax.f32 %v3063, %v3064
        %v3066 = vrot.slane %v3065, 2
        %v3067 = vmax.f32 %v3065, %v3066
        %v3068 = vrot.slane %v3067, 1
        %v3069 = vmax.f32 %v3067, %v3068
        %v3070 = vpack.i.bf16 %v3069, %v3069
        %v3071 = vmax.bf16 %v1723, %v1727
        %v3072 = vmax.bf16 %v3071, %v1731
        %v3073 = vmax.bf16 %v3072, %v1735
        %v3074 = vunpack.i.l.bf16 %v3073
        %v3075 = vunpack.i.h.bf16 %v3073
        %v3076 = vmax.f32 %v3074, %v3075
        %v3077 = vrot.slane %v3076, 4
        %v3078 = vmax.f32 %v3076, %v3077
        %v3079 = vrot.slane %v3078, 2
        %v3080 = vmax.f32 %v3078, %v3079
        %v3081 = vrot.slane %v3080, 1
        %v3082 = vmax.f32 %v3080, %v3081
        %v3083 = vpack.i.bf16 %v3082, %v3082
        %v3084 = vmax.bf16 %v1724, %v1728
        %v3085 = vmax.bf16 %v3084, %v1732
        %v3086 = vmax.bf16 %v3085, %v1736
        %v3087 = vunpack.i.l.bf16 %v3086
        %v3088 = vunpack.i.h.bf16 %v3086
        %v3089 = vmax.f32 %v3087, %v3088
        %v3090 = vrot.slane %v3089, 4
        %v3091 = vmax.f32 %v3089, %v3090
        %v3092 = vrot.slane %v3091, 2
        %v3093 = vmax.f32 %v3091, %v3092
        %v3094 = vrot.slane %v3093, 1
        %v3095 = vmax.f32 %v3093, %v3094
        %v3096 = vpack.i.bf16 %v3095, %v3095
        %v3177 = vunpack.c.l.b16 %v2069
        %v3178 = vunpack.c.l.b16 %v2082
        %v3179 = vunpack.c.l.b16 %v2095
        %v3180 = vunpack.c.l.b16 %v2108
        %v3181 = vunpack.c.l.b16 %v2121
        %v3182 = vunpack.c.l.b16 %v2134
        %v3183 = vunpack.c.l.b16 %v2147
        %v3184 = vunpack.c.l.b16 %v2160
        %v3185 = vunpack.c.l.b16 %v2173
        %v3186 = vunpack.c.l.b16 %v2186
        %v3187 = vunpack.c.l.b16 %v2199
        %v3188 = vunpack.c.l.b16 %v2212
        %v3189 = vunpack.c.l.b16 %v2225
        %v3190 = vunpack.c.l.b16 %v2238
        %v3191 = vunpack.c.l.b16 %v2251
        %v3192 = vunpack.c.l.b16 %v2264
        %v3193 = vunpack.c.l.b16 %v2277
        %v3194 = vunpack.c.l.b16 %v2290
        %v3195 = vunpack.c.l.b16 %v2303
        %v3196 = vunpack.c.l.b16 %v2316
        %v3197 = vunpack.c.l.b16 %v2329
        %v3198 = vunpack.c.l.b16 %v2342
        %v3199 = vunpack.c.l.b16 %v2355
        %v3200 = vunpack.c.l.b16 %v2368
        %v3201 = vunpack.c.l.b16 %v2381
        %v3202 = vunpack.c.l.b16 %v2394
        %v3203 = vunpack.c.l.b16 %v2407
        %v3204 = vunpack.c.l.b16 %v2420
        %v3205 = vunpack.c.l.b16 %v2433
        %v3206 = vunpack.c.l.b16 %v2446
        %v3207 = vunpack.c.l.b16 %v2459
        %v3208 = vunpack.c.l.b16 %v2472
        %v3209 = vunpack.c.l.b16 %v2485
        %v3210 = vunpack.c.l.b16 %v2498
        %v3211 = vunpack.c.l.b16 %v2511
        %v3212 = vunpack.c.l.b16 %v2524
        %v3213 = vunpack.c.l.b16 %v2537
        %v3214 = vunpack.c.l.b16 %v2550
        %v3215 = vunpack.c.l.b16 %v2563
        %v3216 = vunpack.c.l.b16 %v2576
        %v3217 = vunpack.c.l.b16 %v2589
        %v3218 = vunpack.c.l.b16 %v2602
        %v3219 = vunpack.c.l.b16 %v2615
        %v3220 = vunpack.c.l.b16 %v2628
        %v3221 = vunpack.c.l.b16 %v2641
        %v3222 = vunpack.c.l.b16 %v2654
        %v3223 = vunpack.c.l.b16 %v2667
        %v3224 = vunpack.c.l.b16 %v2680
        %v3225 = vunpack.c.l.b16 %v2693
        %v3226 = vunpack.c.l.b16 %v2706
        %v3227 = vunpack.c.l.b16 %v2719
        %v3228 = vunpack.c.l.b16 %v2732
        %v3229 = vunpack.c.l.b16 %v2745
        %v3230 = vunpack.c.l.b16 %v2758
        %v3231 = vunpack.c.l.b16 %v2771
        %v3232 = vunpack.c.l.b16 %v2784
        %v3233 = vunpack.c.l.b16 %v2797
        %v3234 = vunpack.c.l.b16 %v2810
        %v3235 = vunpack.c.l.b16 %v2823
        %v3236 = vunpack.c.l.b16 %v2836
        %v3237 = vunpack.c.l.b16 %v2849
        %v3238 = vunpack.c.l.b16 %v2862
        %v3239 = vunpack.c.l.b16 %v2875
        %v3240 = vunpack.c.l.b16 %v2888
        %v3241 = vunpack.c.l.b16 %v2901
        %v3242 = vunpack.c.l.b16 %v2914
        %v3243 = vunpack.c.l.b16 %v2927
        %v3244 = vunpack.c.l.b16 %v2940
        %v3245 = vunpack.c.l.b16 %v2953
        %v3246 = vunpack.c.l.b16 %v2966
        %v3247 = vunpack.c.l.b16 %v2979
        %v3248 = vunpack.c.l.b16 %v2992
        %v3249 = vunpack.c.l.b16 %v3005
        %v3250 = vunpack.c.l.b16 %v3018
        %v3251 = vunpack.c.l.b16 %v3031
        %v3252 = vunpack.c.l.b16 %v3044
        %v3253 = vunpack.c.l.b16 %v3057
        %v3254 = vunpack.c.l.b16 %v3070
        %v3255 = vunpack.c.l.b16 %v3083
        %v3256 = vunpack.c.l.b16 %v3096
        %v3257 = vpack.c.b16 %v3178, %v3177
        %v3258 = vpack.c.b16 %v3180, %v3179
        %v3259 = vpack.c.b16 %v3182, %v3181
        %v3260 = vpack.c.b16 %v3184, %v3183
        %v3261 = vpack.c.b16 %v3186, %v3185
        %v3262 = vpack.c.b16 %v3188, %v3187
        %v3263 = vpack.c.b16 %v3190, %v3189
        %v3264 = vpack.c.b16 %v3192, %v3191
        %v3265 = vpack.c.b16 %v3194, %v3193
        %v3266 = vpack.c.b16 %v3196, %v3195
        %v3267 = vpack.c.b16 %v3198, %v3197
        %v3268 = vpack.c.b16 %v3200, %v3199
        %v3269 = vpack.c.b16 %v3202, %v3201
        %v3270 = vpack.c.b16 %v3204, %v3203
        %v3271 = vpack.c.b16 %v3206, %v3205
        %v3272 = vpack.c.b16 %v3208, %v3207
        %v3273 = vpack.c.b16 %v3210, %v3209
        %v3274 = vpack.c.b16 %v3212, %v3211
        %v3275 = vpack.c.b16 %v3214, %v3213
        %v3276 = vpack.c.b16 %v3216, %v3215
        %v3277 = vpack.c.b16 %v3218, %v3217
        %v3278 = vpack.c.b16 %v3220, %v3219
        %v3279 = vpack.c.b16 %v3222, %v3221
        %v3280 = vpack.c.b16 %v3224, %v3223
        %v3281 = vpack.c.b16 %v3226, %v3225
        %v3282 = vpack.c.b16 %v3228, %v3227
        %v3283 = vpack.c.b16 %v3230, %v3229
        %v3284 = vpack.c.b16 %v3232, %v3231
        %v3285 = vpack.c.b16 %v3234, %v3233
        %v3286 = vpack.c.b16 %v3236, %v3235
        %v3287 = vpack.c.b16 %v3238, %v3237
        %v3288 = vpack.c.b16 %v3240, %v3239
        %v3289 = vpack.c.b16 %v3242, %v3241
        %v3290 = vpack.c.b16 %v3244, %v3243
        %v3291 = vpack.c.b16 %v3246, %v3245
        %v3292 = vpack.c.b16 %v3248, %v3247
        %v3293 = vpack.c.b16 %v3250, %v3249
        %v3294 = vpack.c.b16 %v3252, %v3251
        %v3295 = vpack.c.b16 %v3254, %v3253
        %v3296 = vpack.c.b16 %v3256, %v3255
        %v3297 = vunpack.c.l.b16 %v3257
        %v3298 = vunpack.c.h.b16 %v3257
        %v3299 = vunpack.c.l.b16 %v3258
        %v3300 = vunpack.c.h.b16 %v3258
        %v3301 = vunpack.c.l.b16 %v3259
        %v3302 = vunpack.c.h.b16 %v3259
        %v3303 = vunpack.c.l.b16 %v3260
        %v3304 = vunpack.c.h.b16 %v3260
        %v3305 = vunpack.c.l.b16 %v3261
        %v3306 = vunpack.c.h.b16 %v3261
        %v3307 = vunpack.c.l.b16 %v3262
        %v3308 = vunpack.c.h.b16 %v3262
        %v3309 = vunpack.c.l.b16 %v3263
        %v3310 = vunpack.c.h.b16 %v3263
        %v3311 = vunpack.c.l.b16 %v3264
        %v3312 = vunpack.c.h.b16 %v3264
        %v3313 = vunpack.c.l.b16 %v3265
        %v3314 = vunpack.c.h.b16 %v3265
        %v3315 = vunpack.c.l.b16 %v3266
        %v3316 = vunpack.c.h.b16 %v3266
        %v3317 = vunpack.c.l.b16 %v3267
        %v3318 = vunpack.c.h.b16 %v3267
        %v3319 = vunpack.c.l.b16 %v3268
        %v3320 = vunpack.c.h.b16 %v3268
        %v3321 = vunpack.c.l.b16 %v3269
        %v3322 = vunpack.c.h.b16 %v3269
        %v3323 = vunpack.c.l.b16 %v3270
        %v3324 = vunpack.c.h.b16 %v3270
        %v3325 = vunpack.c.l.b16 %v3271
        %v3326 = vunpack.c.h.b16 %v3271
        %v3327 = vunpack.c.l.b16 %v3272
        %v3328 = vunpack.c.h.b16 %v3272
        %v3329 = vunpack.c.l.b16 %v3273
        %v3330 = vunpack.c.h.b16 %v3273
        %v3331 = vunpack.c.l.b16 %v3274
        %v3332 = vunpack.c.h.b16 %v3274
        %v3333 = vunpack.c.l.b16 %v3275
        %v3334 = vunpack.c.h.b16 %v3275
        %v3335 = vunpack.c.l.b16 %v3276
        %v3336 = vunpack.c.h.b16 %v3276
        %v3337 = vunpack.c.l.b16 %v3277
        %v3338 = vunpack.c.h.b16 %v3277
        %v3339 = vunpack.c.l.b16 %v3278
        %v3340 = vunpack.c.h.b16 %v3278
        %v3341 = vunpack.c.l.b16 %v3279
        %v3342 = vunpack.c.h.b16 %v3279
        %v3343 = vunpack.c.l.b16 %v3280
        %v3344 = vunpack.c.h.b16 %v3280
        %v3345 = vunpack.c.l.b16 %v3281
        %v3346 = vunpack.c.h.b16 %v3281
        %v3347 = vunpack.c.l.b16 %v3282
        %v3348 = vunpack.c.h.b16 %v3282
        %v3349 = vunpack.c.l.b16 %v3283
        %v3350 = vunpack.c.h.b16 %v3283
        %v3351 = vunpack.c.l.b16 %v3284
        %v3352 = vunpack.c.h.b16 %v3284
        %v3353 = vunpack.c.l.b16 %v3285
        %v3354 = vunpack.c.h.b16 %v3285
        %v3355 = vunpack.c.l.b16 %v3286
        %v3356 = vunpack.c.h.b16 %v3286
        %v3357 = vunpack.c.l.b16 %v3287
        %v3358 = vunpack.c.h.b16 %v3287
        %v3359 = vunpack.c.l.b16 %v3288
        %v3360 = vunpack.c.h.b16 %v3288
        %v3361 = vunpack.c.l.b16 %v3289
        %v3362 = vunpack.c.h.b16 %v3289
        %v3363 = vunpack.c.l.b16 %v3290
        %v3364 = vunpack.c.h.b16 %v3290
        %v3365 = vunpack.c.l.b16 %v3291
        %v3366 = vunpack.c.h.b16 %v3291
        %v3367 = vunpack.c.l.b16 %v3292
        %v3368 = vunpack.c.h.b16 %v3292
        %v3369 = vunpack.c.l.b16 %v3293
        %v3370 = vunpack.c.h.b16 %v3293
        %v3371 = vunpack.c.l.b16 %v3294
        %v3372 = vunpack.c.h.b16 %v3294
        %v3373 = vunpack.c.l.b16 %v3295
        %v3374 = vunpack.c.h.b16 %v3295
        %v3375 = vunpack.c.l.b16 %v3296
        %v3376 = vunpack.c.h.b16 %v3296
        %vm3377 = vcmask 1041409
        %v3378 = vsel %vm3377, %v3301, %v3297
        %vm3379 = vcmask 1042434
        %v3380 = vsel %vm3379, %v3305, %v3378
        %vm3381 = vcmask 1043459
        %v3382 = vsel %vm3381, %v3309, %v3380
        %vm3383 = vcmask 1044484
        %v3384 = vsel %vm3383, %v3313, %v3382
        %vm3385 = vcmask 1045509
        %v3386 = vsel %vm3385, %v3317, %v3384
        %vm3387 = vcmask 1046534
        %v3388 = vsel %vm3387, %v3321, %v3386
        %vm3389 = vcmask 1047559
        %v3390 = vsel %vm3389, %v3325, %v3388
        %v3391 = vsel %vm3377, %v3302, %v3298
        %v3392 = vsel %vm3379, %v3306, %v3391
        %v3393 = vsel %vm3381, %v3310, %v3392
        %v3394 = vsel %vm3383, %v3314, %v3393
        %v3395 = vsel %vm3385, %v3318, %v3394
        %v3396 = vsel %vm3387, %v3322, %v3395
        %v3397 = vsel %vm3389, %v3326, %v3396
        %v3398 = vsel %vm3377, %v3303, %v3299
        %v3399 = vsel %vm3379, %v3307, %v3398
        %v3400 = vsel %vm3381, %v3311, %v3399
        %v3401 = vsel %vm3383, %v3315, %v3400
        %v3402 = vsel %vm3385, %v3319, %v3401
        %v3403 = vsel %vm3387, %v3323, %v3402
        %v3404 = vsel %vm3389, %v3327, %v3403
        %v3405 = vsel %vm3377, %v3304, %v3300
        %v3406 = vsel %vm3379, %v3308, %v3405
        %v3407 = vsel %vm3381, %v3312, %v3406
        %v3408 = vsel %vm3383, %v3316, %v3407
        %v3409 = vsel %vm3385, %v3320, %v3408
        %v3410 = vsel %vm3387, %v3324, %v3409
        %v3411 = vsel %vm3389, %v3328, %v3410
        %v3412 = vsel %vm3377, %v3333, %v3329
        %v3413 = vsel %vm3379, %v3337, %v3412
        %v3414 = vsel %vm3381, %v3341, %v3413
        %v3415 = vsel %vm3383, %v3345, %v3414
        %v3416 = vsel %vm3385, %v3349, %v3415
        %v3417 = vsel %vm3387, %v3353, %v3416
        %v3418 = vsel %vm3389, %v3357, %v3417
        %v3419 = vsel %vm3377, %v3334, %v3330
        %v3420 = vsel %vm3379, %v3338, %v3419
        %v3421 = vsel %vm3381, %v3342, %v3420
        %v3422 = vsel %vm3383, %v3346, %v3421
        %v3423 = vsel %vm3385, %v3350, %v3422
        %v3424 = vsel %vm3387, %v3354, %v3423
        %v3425 = vsel %vm3389, %v3358, %v3424
        %v3426 = vsel %vm3377, %v3335, %v3331
        %v3427 = vsel %vm3379, %v3339, %v3426
        %v3428 = vsel %vm3381, %v3343, %v3427
        %v3429 = vsel %vm3383, %v3347, %v3428
        %v3430 = vsel %vm3385, %v3351, %v3429
        %v3431 = vsel %vm3387, %v3355, %v3430
        %v3432 = vsel %vm3389, %v3359, %v3431
        %v3433 = vsel %vm3377, %v3336, %v3332
        %v3434 = vsel %vm3379, %v3340, %v3433
        %v3435 = vsel %vm3381, %v3344, %v3434
        %v3436 = vsel %vm3383, %v3348, %v3435
        %v3437 = vsel %vm3385, %v3352, %v3436
        %v3438 = vsel %vm3387, %v3356, %v3437
        %v3439 = vsel %vm3389, %v3360, %v3438
        %v3440 = vsel %vm3377, %v3365, %v3361
        %v3441 = vsel %vm3379, %v3369, %v3440
        %v3442 = vsel %vm3381, %v3373, %v3441
        %v3443 = vsel %vm3377, %v3366, %v3362
        %v3444 = vsel %vm3379, %v3370, %v3443
        %v3445 = vsel %vm3381, %v3374, %v3444
        %v3446 = vsel %vm3377, %v3367, %v3363
        %v3447 = vsel %vm3379, %v3371, %v3446
        %v3448 = vsel %vm3381, %v3375, %v3447
        %v3449 = vsel %vm3377, %v3368, %v3364
        %v3450 = vsel %vm3379, %v3372, %v3449
        %v3451 = vsel %vm3381, %v3376, %v3450
        %v3452 = vpack.c.b16 %v3397, %v3390
        %v3453 = vpack.c.b16 %v3411, %v3404
        %v3454 = vpack.c.b16 %v3425, %v3418
        %v3455 = vpack.c.b16 %v3439, %v3432
        %v3456 = vpack.c.b16 %v3445, %v3442
        %v3457 = vpack.c.b16 %v3451, %v3448
        %3464 = vst [vmem:[%s136] sm:$0xff] %v3452
        %3465 = vst [vmem:[%s136 + $0x8] sm:$0xff] %v3453
        %3466 = vst [vmem:[%s136 + $0x10] sm:$0xff] %v3454
        %3467 = vst [vmem:[%s136 + $0x18] sm:$0xff] %v3455
        %3468 = vst [vmem:[%s136 + $0x20] sm:$0x33] %v3456
        %3469 = vst [vmem:[%s136 + $0x28] sm:$0x33] %v3457
        %p3470 = scmp.lt.s32.totalorder %s15, 1
        %s3471 = scalar_select %p3470, %s15, 1
        %s3472 = smul.addr %s3471, 12
        %s3473 = smul.addr %s3472, 4
        %s3474 = scalar_lea.vmem %s1, %s3473
        // Predicated region
        $region29: #{tpu_custom_call.1} parent=23 // pred_check
          %p3475 = pneg %p59
        $region30: #{tpu_custom_call.1} parent=23 // pred_check_branch
          %3477 = sbr.rel (%p3475) target = $region32
        $region31: #{tpu_custom_call.1} parent=23 // pred_region
          _
        $region32: #{tpu_custom_call.1} parent=23 // pred_fallthru
          _
      $region24: #{tpu_custom_call.1} parent=5 // pred_fallthru
        _
      %p3478 = scmp.le.s32.totalorder 2, %s10
      // Predicated region
      $region33: #{tpu_custom_call.1} parent=5 // pred_check
        %p3479 = pneg %p3478
      $region34: #{tpu_custom_call.1} parent=5 // pred_check_branch
        %3481 = sbr.rel (%p3479) target = $region36
      $region35: #{tpu_custom_call.1} parent=5 // pred_region
        %s3482 = ssub.s32 %s10, 2
        // Predicated region
        $region37: #{tpu_custom_call.1} parent=35 // pred_check
          %p3483 = pneg %p65
        $region38: #{tpu_custom_call.1} parent=35 // pred_check_branch
          %3485 = sbr.rel (%p3483) target = $region40
        $region39: #{tpu_custom_call.1} parent=35 // pred_region
          %p3486 = scmp.lt.s32.totalorder %s16, 1
          %s3487 = scalar_select %p3486, %s16, 1
          %s3488 = smul.addr %s3487, 12
          %s3489 = smul.addr %s3488, 4
          %s3490 = scalar_lea.vmem %s1, %s3489
        $region40: #{tpu_custom_call.1} parent=35 // pred_fallthru
          _
      $region36: #{tpu_custom_call.1} parent=5 // pred_fallthru
        _
    $region6: #{tpu_custom_call.1} parent=1 // loop_footer
      %s14 = sadd.s32 1, %s10
    $region7: #{tpu_custom_call.1} parent=1 // loop_footer_branch
      %9 = sbr.rel target = $region3
    $region8: #{tpu_custom_call.1} parent=1 // loop_exit
      _
    %3491 = vsyncpa [#allocation3], 1
    %s3492 = scalar_lea.sflag [#allocation3], 1
    %3493 = vsyncpa %s3492, 1

</llo_original>
